<compile_context>
chip_gen: v7x
topology: tpu7x:2x2x1
jax: 0.10.0
libtpu: 0.0.40
codegen_flags: <defaults>
</compile_context>

<pallas_src>
import jax
import jax.numpy as jnp
from jax import lax
from jax.experimental import pallas as pl
from jax.experimental.pallas import tpu as pltpu


def _round_up(x, m):
    return ((x + m - 1) // m) * m


def _chip_vmem_ceiling():
    try:
        cap = int(pltpu.get_tpu_info().vmem_capacity_bytes)
    except Exception:
        cap = 64 * 1024 * 1024          # conservative (v7x per-core VMEM)
    return (cap * 3) // 4               # leave headroom for compiler scratch


def _vmem_limit(nbytes):
    ceiling = _chip_vmem_ceiling()
    return int(min(ceiling, max(16 * 1024 * 1024, nbytes + (4 << 20))))


def _supports_bf16_eup():
    # bf16 exp/log on the EUP is ~2x f32 on v6e/v7x; not available on <= v5.
    try:
        kind = jax.devices()[0].device_kind.lower()
    except Exception:
        return False
    return not any(tag in kind for tag in ("v2", "v3", "v4", "v5"))


def _pick_v_tile(vp, target=512):
    # TODO(synk): sweep 512-4096 at production vocab sizes.
    t = min(vp, target)
    while vp % t != 0:
        t -= 128
    return max(t, 128)


# -----------------------------------------------------------------------------
# Encoder kernel: bb batch elements per grid step (MXU sees bb*Ts rows).
# -----------------------------------------------------------------------------
def encoder_kernel(emb_ref, valid_ref, w_enc_ref, b_enc_ref, w_mask_ref, w_hc_ref,
                   enc_out_ref, softmask_ref, h_ref, c_ref):
    bb, Ts, E = emb_ref.shape
    H2 = w_enc_ref.shape[1]
    H = h_ref.shape[-1]

    # big matmul on flattened rows so the MXU sees M = bb*Ts (>= 128)
    emb2 = emb_ref[...].reshape(bb * Ts, E)                        # bf16
    enc2 = jnp.tanh(
        jnp.dot(emb2, w_enc_ref[...], preferred_element_type=jnp.float32)
        + b_enc_ref[...])                                          # (bb*Ts, 2H) f32
    enc_b3 = enc2.astype(jnp.bfloat16).reshape(bb, Ts, H2)
    enc_out_ref[...] = enc_b3

    # softmask head: VPU multiply + lane reduction; lane-dense (bb, 1, Ts) store
    enc3 = enc2.reshape(bb, Ts, H2)
    wm = w_mask_ref[...].astype(jnp.float32)                       # (1, 2H)
    mask_logit = jnp.sum(enc3 * wm, axis=-1)                       # (bb, Ts)
    softmask_ref[...] = jax.nn.sigmoid(mask_logit)[:, None, :]

    # mask-weighted pooled state (ignores padded source positions)
    valid = valid_ref[...]                                         # (bb, 1, Ts) f32
    nvalid = jnp.maximum(jnp.sum(valid, axis=-1, keepdims=True), 1.0)     # (bb,1,1)
    pooled = jnp.einsum('bqt,bth->bqh', valid.astype(jnp.bfloat16), enc_b3,
                        preferred_element_type=jnp.float32) / nvalid      # (bb,1,2H)
    pooled2 = pooled.reshape(bb, H2).astype(jnp.bfloat16)

    # fused h/c head: one (2H, 2H) matmul, lanes split at H
    hc = jnp.tanh(jnp.dot(pooled2, w_hc_ref[...],
                          preferred_element_type=jnp.float32))     # (bb, 2H)
    h_ref[...] = hc[:, :H][:, None, :]
    c_ref[...] = hc[:, H:][:, None, :]


def run_encoder(src_emb, valid, params, bb):
    Bp, Ts, E = src_emb.shape
    H2 = params["w_enc"].shape[1]
    H = H2 // 2
    n_b = Bp // bb

    def wspec(arr):
        nd = arr.ndim
        return pl.BlockSpec(arr.shape, lambda i, _nd=nd: (0,) * _nd)

    nbytes = (2 * (bb * Ts * E * 2 + bb * Ts * 4)                   # inputs (dbuf)
              + 2 * (E * H2 * 2 + H2 * 4 + H2 * 2 + H2 * H2 * 2)    # weights (dbuf)
              + 2 * (bb * Ts * H2 * 2 + bb * Ts * 4 + 2 * bb * H * 4)   # outputs
              + 4 * bb * Ts * H2 * 4)                               # f32 temporaries

    out_shape = (
        jax.ShapeDtypeStruct((Bp, Ts, H2), jnp.bfloat16),   # enc_outputs
        jax.ShapeDtypeStruct((Bp, 1, Ts), jnp.float32),     # softmasks (lane-dense)
        jax.ShapeDtypeStruct((Bp, 1, H), jnp.float32),      # h
        jax.ShapeDtypeStruct((Bp, 1, H), jnp.float32),      # c
    )
    return pl.pallas_call(
        encoder_kernel,
        out_shape=out_shape,
        grid=(n_b,),
        in_specs=[
            pl.BlockSpec((bb, Ts, E), lambda i: (i, 0, 0)),
            pl.BlockSpec((bb, 1, Ts), lambda i: (i, 0, 0)),
            wspec(params["w_enc"]),
            wspec(params["b_enc"]),
            wspec(params["w_mask"]),
            wspec(params["w_hc"]),
        ],
        out_specs=(
            pl.BlockSpec((bb, Ts, H2), lambda i: (i, 0, 0)),
            pl.BlockSpec((bb, 1, Ts), lambda i: (i, 0, 0)),
            pl.BlockSpec((bb, 1, H), lambda i: (i, 0, 0)),
            pl.BlockSpec((bb, 1, H), lambda i: (i, 0, 0)),
        ),
        compiler_params=pltpu.CompilerParams(
            dimension_semantics=("parallel",),
            vmem_limit_bytes=_vmem_limit(nbytes)),
    )(src_emb, valid, params["w_enc"], params["b_enc"],
      params["w_mask"], params["w_hc"])


# -----------------------------------------------------------------------------
# Decoder kernel: attention + pointer-generator mixing, vocab tiled over an
# innermost "arbitrary" grid axis (output-projection weights streamed per tile).
# -----------------------------------------------------------------------------
def make_decoder_kernel(exp_bf16):
    def decoder_kernel(tgt_emb_ref, enc_out_ref, pad_bias_ref, h_ref, ext_ids_ref,
                       w_dec_ref, w_state_ref, b_dec_ref,
                       w_out_d_ref, w_out_c_ref, b_out_ref,
                       w_pgen_d_ref, w_pgen_c_ref, b_pgen_ref,
                       logits_ref,
                       dec_sc, ctx_sc, attn_sc, pgen_sc, logit_slab, copy_slab):
        v = pl.program_id(2)
        v_tile = w_out_d_ref.shape[1]
        Ts = enc_out_ref.shape[0]

        # ---- per-(b, Td-tile) work, hoisted across the vocab sweep ----
        @pl.when(v == 0)
        def _():
            tgt_emb = tgt_emb_ref[...]                             # (Td_t, E)  bf16
            enc_out = enc_out_ref[...]                             # (Ts, 2H)   bf16
            pad_bias = pad_bias_ref[...]                           # (1, Ts)    f32
            h0 = h_ref[...].astype(jnp.bfloat16)                   # (1, H)

            dec_feat = jnp.tanh(
                jnp.dot(tgt_emb, w_dec_ref[...], preferred_element_type=jnp.float32)
                + jnp.dot(h0, w_state_ref[...], preferred_element_type=jnp.float32)
                + b_dec_ref[...])                                  # (Td_t, 2H) f32
            dec_b = dec_feat.astype(jnp.bfloat16)
            dec_sc[...] = dec_b

            # attention scores over source (contract feature dims, no transpose)
            scores = lax.dot_general(dec_b, enc_out,
                                     dimension_numbers=(((1,), (1,)), ((), ())),
                                     preferred_element_type=jnp.float32)   # (Td_t, Ts)
            scores = scores + pad_bias       # additive -1e9 bias masks padding
            scores = scores - jnp.max(scores, axis=-1, keepdims=True)
            exp_s = jnp.exp(scores)
            denom = jnp.maximum(jnp.sum(exp_s, axis=-1, keepdims=True), 1e-20)
            attn = exp_s * pl.reciprocal(denom, approx=True)
            attn_b = attn.astype(jnp.bfloat16)
            attn_sc[...] = attn_b

            ctx = jnp.dot(attn_b, enc_out, preferred_element_type=jnp.float32)
            ctx_sc[...] = ctx.astype(jnp.bfloat16)                 # (Td_t, 2H)

            # p_gen gate: VPU elementwise-mul + row-sum (no 1-lane matmuls)
            pg = (jnp.sum(dec_feat * w_pgen_d_ref[...], axis=-1, keepdims=True)
                  + jnp.sum(ctx * w_pgen_c_ref[...], axis=-1, keepdims=True)
                  + b_pgen_ref[...])                               # (Td_t, 1)
            pgen_sc[...] = jax.nn.sigmoid(pg)

        # ---- per vocab tile: generation logits + copy scatter (streamed weights)
        dec_b = dec_sc[...]
        ctx_b = ctx_sc[...]
        attn_b = attn_sc[...]

        logits_tile = (jnp.dot(dec_b, w_out_d_ref[...], preferred_element_type=jnp.float32)
                       + jnp.dot(ctx_b, w_out_c_ref[...], preferred_element_type=jnp.float32)
                       + b_out_ref[...])                           # (Td_t, v_tile)

        # TODO(synk): scatter depends only on (batch, vocab tile) and is rebuilt
        # for every Td tile; cache it when (Ts * Vp) fits VMEM at production Td.
        ext_ids = ext_ids_ref[...]                                 # (Ts, 1) int32
        col = lax.broadcasted_iota(jnp.int32, (Ts, v_tile), 1) + v * v_tile
        scatter = jnp.where(col == ext_ids, 1.0, 0.0).astype(jnp.bfloat16)
        copy_tile = jnp.dot(attn_b, scatter, preferred_element_type=jnp.float32)

        logit_slab[v] = logits_tile
        copy_slab[v] = copy_tile

        # ---- last vocab tile: full-vocab softmax + pointer-generator mix ----
        @pl.when(v == pl.num_programs(2) - 1)
        def _():
            n_v = logit_slab.shape[0]
            p_gen = pgen_sc[...]                                   # (Td_t, 1)
            slab = logit_slab[...]                                 # (n_v, Td_t, vt) f32
            m = jnp.max(jnp.max(slab, axis=-1, keepdims=True), axis=0, keepdims=True)
            vl = slab - m
            if exp_bf16:
                ev = jnp.exp(vl.astype(jnp.bfloat16)).astype(jnp.float32)
            else:
                ev = jnp.exp(vl)
            denom = jnp.sum(jnp.sum(ev, axis=-1, keepdims=True), axis=0, keepdims=True)
            vocab_dist = ev * (1.0 / denom)                        # exact normalization
            mix = p_gen * vocab_dist + (1.0 - p_gen) * copy_slab[...] + 1e-12
            if exp_bf16:
                out = jnp.log(mix.astype(jnp.bfloat16))
            else:
                out = jnp.log(mix)
            out = out.astype(logits_ref.dtype)                     # (n_v, Td_t, vt)
            for i in range(n_v):          # static unroll, 128-aligned lane-dense stores
                logits_ref[:, i * v_tile:(i + 1) * v_tile] = out[i]

    return decoder_kernel


def run_decoder(tgt_emb, enc_out, pad_bias, h, ext_ids, params,
                td_tile, v_tile, exp_bf16):
    B, Td, E = tgt_emb.shape
    _, Ts, H2 = enc_out.shape
    H = h.shape[2]
    Vp = params["w_out_d"].shape[1]
    n_t = Td // td_tile
    n_v = Vp // v_tile

    def wspec(arr):
        nd = arr.ndim
        return pl.BlockSpec(arr.shape, lambda b, t, vv, _nd=nd: (0,) * _nd)

    nbytes = (
        2 * (td_tile * E * 2 + Ts * H2 * 2 + Ts * 4 + H * 4 + Ts * 4)      # per-(b,t) in
        + 2 * (E * H2 * 2 + H * H2 * 2 + H2 * 4 + 2 * H2 * 4 + 4)          # small weights
        + 2 * (2 * H2 * v_tile * 2 + v_tile * 4)                           # streamed tiles
        + 2 * (td_tile * Vp * 2)                                           # bf16 output
        + (2 * td_tile * H2 * 2 + td_tile * Ts * 2 + td_tile * 4)          # small scratch
        + 2 * (td_tile * Vp * 4)                                           # slabs
        + 4 * (td_tile * Vp * 4))                                          # final temps

    return pl.pallas_call(
        make_decoder_kernel(exp_bf16),
        out_shape=jax.ShapeDtypeStruct((B, Td, Vp), jnp.bfloat16),
        grid=(B, n_t, n_v),
        in_specs=[
            pl.BlockSpec((None, td_tile, E), lambda b, t, vv: (b, t, 0)),
            pl.BlockSpec((None, Ts, H2), lambda b, t, vv: (b, 0, 0)),
            pl.BlockSpec((None, 1, Ts), lambda b, t, vv: (b, 0, 0)),
            pl.BlockSpec((None, 1, H), lambda b, t, vv: (b, 0, 0)),
            pl.BlockSpec((None, Ts, 1), lambda b, t, vv: (b, 0, 0)),
            wspec(params["w_dec"]),
            wspec(params["w_state"]),
            wspec(params["b_dec"]),
            pl.BlockSpec((H2, v_tile), lambda b, t, vv: (0, vv)),
            pl.BlockSpec((H2, v_tile), lambda b, t, vv: (0, vv)),
            pl.BlockSpec((1, v_tile), lambda b, t, vv: (0, vv)),
            wspec(params["w_pgen_d"]),
            wspec(params["w_pgen_c"]),
            wspec(params["b_pgen"]),
        ],
        out_specs=pl.BlockSpec((None, td_tile, Vp), lambda b, t, vv: (b, t, 0)),
        scratch_shapes=[
            pltpu.VMEM((td_tile, H2), jnp.bfloat16),      # dec features
            pltpu.VMEM((td_tile, H2), jnp.bfloat16),      # context
            pltpu.VMEM((td_tile, Ts), jnp.bfloat16),      # attention
            pltpu.VMEM((td_tile, 1), jnp.float32),        # p_gen
            pltpu.VMEM((n_v, td_tile, v_tile), jnp.float32),   # staged logits
            pltpu.VMEM((n_v, td_tile, v_tile), jnp.float32),   # staged copy dist
        ],
        compiler_params=pltpu.CompilerParams(
            dimension_semantics=("parallel", "parallel", "arbitrary"),
            vmem_limit_bytes=_vmem_limit(nbytes)),
    )(tgt_emb, enc_out, pad_bias, h, ext_ids,
      params["w_dec"], params["w_state"], params["b_dec"],
      params["w_out_d"], params["w_out_c"], params["b_out"],
      params["w_pgen_d"], params["w_pgen_c"], params["b_pgen"])


# -----------------------------------------------------------------------------
# Full forward pass (glue in plain JAX: embedding lookup, padding, mask build).
# -----------------------------------------------------------------------------
def graph_pointer_generator_forward(batch, params):
    src = batch["context_idxs"]                     # (B, Ts) int32
    tgt = batch["tgt_idxs"]                         # (B, Ttgt) int32
    ext = batch["context_batch_extend_vocab"]       # (B, Ts) int32 (use_copy=True)

    emb_table = params["embedding"]                 # (V, E) bf16
    B, Ts_real = src.shape
    Vp = params["w_out_d"].shape[1]

    # pad source length to a lane-width multiple (pad id 0)
    Ts = _round_up(max(Ts_real, 8), 128)
    if Ts != Ts_real:
        src_p = jnp.pad(src, ((0, 0), (0, Ts - Ts_real)))
        ext_p = jnp.pad(ext, ((0, 0), (0, Ts - Ts_real)))
    else:
        src_p, ext_p = src, ext

    src_emb = emb_table[src_p]                      # (B, Ts, E) bf16
    valid = (src_p != 0).astype(jnp.float32)[:, None, :]                 # (B,1,Ts)
    pad_bias = jnp.where(src_p == 0, -1e9, 0.0).astype(jnp.float32)[:, None, :]

    # encoder: several batch elements per grid step so the MXU sees >=128 rows
    bb = max(1, min(B, max(1, 1024 // Ts)))
    B_pad = _round_up(B, bb)
    if B_pad != B:
        src_emb_e = jnp.pad(src_emb, ((0, B_pad - B), (0, 0), (0, 0)))
        valid_e = jnp.pad(valid, ((0, B_pad - B), (0, 0), (0, 0)))
    else:
        src_emb_e, valid_e = src_emb, valid

    enc_out, softmask, h, _c = run_encoder(src_emb_e, valid_e, params, bb)
    enc_out = enc_out[:B]
    h = h[:B]
    softmasks = softmask[:B, 0, :Ts_real]

    # decoder (teacher forcing on tgt[:, :-1])
    tgt_in = tgt[:, :-1]
    td_real = tgt_in.shape[1]
    td_tile = min(64, _round_up(td_real, 16))       # 16-row aligned bf16 blocks
    td_pad = _round_up(td_real, td_tile)
    tgt_emb = emb_table[tgt_in]                     # (B, Td, E) bf16
    if td_pad != td_real:
        tgt_emb = jnp.pad(tgt_emb, ((0, 0), (0, td_pad - td_real), (0, 0)))

    ext_col = ext_p[:, :, None].astype(jnp.int32)   # (B, Ts, 1)
    v_tile = _pick_v_tile(Vp)
    exp_bf16 = _supports_bf16_eup()

    logits_p = run_decoder(tgt_emb, enc_out, pad_bias, h, ext_col, params,
                           td_tile, v_tile, exp_bf16)

    v_real = params["vocab_size"] + int(batch["max_context_oovs"])
    logits = logits_p[:, :td_real, :v_real]         # strip time / vocab padding
    return logits, softmasks


def init_params(key, vocab_size, emb_dim, hidden_dim, max_oovs):
    # feature dims padded to lane width (128) and baked into the weights
    E = _round_up(emb_dim, 128)
    H = _round_up(hidden_dim, 128)
    H2 = 2 * H
    v_real = vocab_size + max_oovs
    Vp = _round_up(v_real, 128)
    ks = jax.random.split(key, 12)

    def nb(k, s):  # bf16 MXU weight
        return (jax.random.normal(k, s, dtype=jnp.float32) * 0.1).astype(jnp.bfloat16)

    def out_w(k):  # random for real vocab, zero for OOV + padding columns
        w = jax.random.normal(k, (H2, vocab_size), dtype=jnp.float32) * 0.1
        return jnp.concatenate(
            [w, jnp.zeros((H2, Vp - vocab_size), jnp.float32)], axis=-1
        ).astype(jnp.bfloat16)

    b_out = jnp.concatenate(
        [jnp.zeros((1, vocab_size), jnp.float32),
         jnp.full((1, Vp - vocab_size), -1e9, jnp.float32)], axis=-1)

    return {
        "vocab_size": vocab_size,
        "embedding": nb(ks[0], (vocab_size, E)),
        # encoder
        "w_enc": nb(ks[1], (E, H2)),
        "b_enc": jnp.zeros((1, H2), jnp.float32),
        "w_mask": nb(ks[2], (1, H2)),          # lane-dense softmask head
        "w_hc": nb(ks[3], (H2, H2)),           # fused [w_h | w_c]
        # decoder
        "w_dec": nb(ks[5], (E, H2)),
        "w_state": nb(ks[8], (H, H2)),
        "b_dec": jnp.zeros((1, H2), jnp.float32),
        "w_out_d": out_w(ks[6]),
        "w_out_c": out_w(ks[7]),
        "b_out": b_out,
        "w_pgen_d": (jax.random.normal(ks[9], (1, H2)) * 0.1).astype(jnp.float32),
        "w_pgen_c": (jax.random.normal(ks[10], (1, H2)) * 0.1).astype(jnp.float32),
        "b_pgen": jnp.zeros((1, 1), jnp.float32),
    }


if __name__ == "__main__":
    # small but tile-aligned shapes; Vext = 1024 -> 2 vocab tiles of 512 so the
    # vocab-tiled path (streamed weights + staged softmax) is exercised.
    B, Ts, Ttgt = 2, 16, 9
    EMB, HID, VOCAB, MAX_OOV = 128, 128, 1000, 24

    key = jax.random.PRNGKey(0)
    kp, k1, k2 = jax.random.split(key, 3)
    params = init_params(kp, VOCAB, EMB, HID, MAX_OOV)

    # source ids with trailing padding (id 0)
    ids = jax.random.randint(k1, (B, Ts), minval=4, maxval=VOCAB, dtype=jnp.int32)
    pad_positions = jnp.arange(Ts) >= (Ts - 4)
    context_idxs = jnp.where(pad_positions[None, :], 0, ids)

    # extended-vocab ids: a few source positions point at OOV slots
    ext = context_idxs
    ext = ext.at[0, 2].set(VOCAB + 0).at[0, 5].set(VOCAB + 1)
    ext = ext.at[1, 3].set(VOCAB + 2).at[1, 6].set(VOCAB + 3)

    tgt_idxs = jax.random.randint(k2, (B, Ttgt), minval=4, maxval=VOCAB,
                                  dtype=jnp.int32)

    batch = {
        "context_idxs": context_idxs,
        "tgt_idxs": tgt_idxs,
        "context_batch_extend_vocab": ext,
        "context_mask": (context_idxs != 0).astype(jnp.float32),
        "max_context_oovs": MAX_OOV,
    }

    logits, softmasks = graph_pointer_generator_forward(batch, params)
    jax.block_until_ready((logits, softmasks))

    assert logits.shape == (B, Ttgt - 1, VOCAB + MAX_OOV), logits.shape
    assert softmasks.shape == (B, Ts), softmasks.shape
    assert bool(jnp.all(jnp.isfinite(logits.astype(jnp.float32))))
    print("KERNEL_OK")
</pallas_src>

<mosaic_0001>
module attributes {stable_mosaic.version = 11 : i64} {
  func.func @encoder_kernel(%arg0: i32, %arg1: memref<2x128x128xbf16, #tpu.memory_space<vmem>>, %arg2: memref<2x1x128xf32, #tpu.memory_space<vmem>>, %arg3: memref<128x256xbf16, #tpu.memory_space<vmem>>, %arg4: memref<1x256xf32, #tpu.memory_space<vmem>>, %arg5: memref<1x256xbf16, #tpu.memory_space<vmem>>, %arg6: memref<256x256xbf16, #tpu.memory_space<vmem>>, %arg7: memref<2x128x256xbf16, #tpu.memory_space<vmem>>, %arg8: memref<2x1x128xf32, #tpu.memory_space<vmem>>, %arg9: memref<2x1x128xf32, #tpu.memory_space<vmem>>, %arg10: memref<2x1x128xf32, #tpu.memory_space<vmem>>) attributes {dimension_semantics = [#tpu.dimension_semantics<parallel>], iteration_bounds = array<i64: 1>, scalar_prefetch = 0 : i64, scratch_operands = 0 : i64, tpu.core_type = #tpu.core_type<tc>, window_params = [{transform_indices = @transform_0, window_bounds = array<i64: 2, 128, 128>}, {transform_indices = @transform_1, window_bounds = array<i64: 2, 1, 128>}, {pipeline_mode = #tpu.pipeline_mode<synchronous>, transform_indices = @transform_2, window_bounds = array<i64: 128, 256>}, {pipeline_mode = #tpu.pipeline_mode<synchronous>, transform_indices = @transform_3, window_bounds = array<i64: 1, 256>}, {pipeline_mode = #tpu.pipeline_mode<synchronous>, transform_indices = @transform_4, window_bounds = array<i64: 1, 256>}, {pipeline_mode = #tpu.pipeline_mode<synchronous>, transform_indices = @transform_5, window_bounds = array<i64: 256, 256>}, {transform_indices = @transform_6, window_bounds = array<i64: 2, 128, 256>}, {transform_indices = @transform_7, window_bounds = array<i64: 2, 1, 128>}, {transform_indices = @transform_8, window_bounds = array<i64: 2, 1, 128>}, {transform_indices = @transform_9, window_bounds = array<i64: 2, 1, 128>}]} {
    %c0 = arith.constant 0 : index
    %c0_0 = arith.constant 0 : index
    %c0_1 = arith.constant 0 : index
    %0 = vector.load %arg1[%c0, %c0_0, %c0_1] : memref<2x128x128xbf16, #tpu.memory_space<vmem>>, vector<2x128x128xbf16>
    %1 = vector.shape_cast %0 : vector<2x128x128xbf16> to vector<256x128xbf16>
    %c0_2 = arith.constant 0 : index
    %c0_3 = arith.constant 0 : index
    %2 = vector.load %arg3[%c0_2, %c0_3] : memref<128x256xbf16, #tpu.memory_space<vmem>>, vector<128x256xbf16>
    %cst = arith.constant dense<0.000000e+00> : vector<256x256xf32>
    %3 = tpu.matmul %1, %2, %cst {dimension_numbers = #tpu.dot_dimension_numbers<[1], [0], [0], [1], [0, 0, 1, 1], [], []>} : vector<256x128xbf16>, vector<128x256xbf16>, vector<256x256xf32> -> vector<256x256xf32>
    %c0_4 = arith.constant 0 : index
    %c0_5 = arith.constant 0 : index
    %4 = vector.load %arg4[%c0_4, %c0_5] : memref<1x256xf32, #tpu.memory_space<vmem>>, vector<1x256xf32>
    %5 = vector.broadcast %4 : vector<1x256xf32> to vector<256x256xf32>
    %6 = arith.addf %3, %5 : vector<256x256xf32>
    %7 = math.tanh %6 : vector<256x256xf32>
    %8 = arith.truncf %7 : vector<256x256xf32> to vector<256x256xbf16>
    %9 = vector.shape_cast %8 : vector<256x256xbf16> to vector<2x128x256xbf16>
    %c0_6 = arith.constant 0 : index
    %c0_7 = arith.constant 0 : index
    %c0_8 = arith.constant 0 : index
    %10 = vector.load %arg7[%c0_6, %c0_7, %c0_8] : memref<2x128x256xbf16, #tpu.memory_space<vmem>>, vector<2x128x256xbf16>
    tpu.vector_store %arg7[%c0_6, %c0_7, %c0_8], %9 {strides = array<i32>} : memref<2x128x256xbf16, #tpu.memory_space<vmem>>, vector<2x128x256xbf16>,
    %11 = vector.shape_cast %7 : vector<256x256xf32> to vector<2x128x256xf32>
    %c0_9 = arith.constant 0 : index
    %c0_10 = arith.constant 0 : index
    %12 = vector.load %arg5[%c0_9, %c0_10] : memref<1x256xbf16, #tpu.memory_space<vmem>>, vector<1x256xbf16>
    %13 = arith.extf %12 : vector<1x256xbf16> to vector<1x256xf32>
    %14 = vector.shape_cast %13 : vector<1x256xf32> to vector<1x1x256xf32>
    %15 = vector.broadcast %14 : vector<1x1x256xf32> to vector<2x128x256xf32>
    %16 = arith.mulf %11, %15 : vector<2x128x256xf32>
    %cst_11 = arith.constant dense<0.000000e+00> : vector<2x128xf32>
    %17 = vector.multi_reduction <add>, %16, %cst_11 [2] : vector<2x128x256xf32> to vector<2x128xf32>
    %18 = arith.negf %17 : vector<2x128xf32>
    %19 = math.exp %18 : vector<2x128xf32>
    %cst_12 = arith.constant 1.000000e+00 : f32
    %20 = vector.broadcast %cst_12 : f32 to vector<2x128xf32>
    %21 = arith.addf %20, %19 : vector<2x128xf32>
    %22 = arith.divf %20, %21 : vector<2x128xf32>
    %23 = vector.shape_cast %22 : vector<2x128xf32> to vector<2x1x128xf32>
    %c0_13 = arith.constant 0 : index
    %c0_14 = arith.constant 0 : index
    %c0_15 = arith.constant 0 : index
    %24 = vector.load %arg8[%c0_13, %c0_14, %c0_15] : memref<2x1x128xf32, #tpu.memory_space<vmem>>, vector<2x1x128xf32>
    tpu.vector_store %arg8[%c0_13, %c0_14, %c0_15], %23 {strides = array<i32>} : memref<2x1x128xf32, #tpu.memory_space<vmem>>, vector<2x1x128xf32>,
    %c0_16 = arith.constant 0 : index
    %c0_17 = arith.constant 0 : index
    %c0_18 = arith.constant 0 : index
    %25 = vector.load %arg2[%c0_16, %c0_17, %c0_18] : memref<2x1x128xf32, #tpu.memory_space<vmem>>, vector<2x1x128xf32>
    %cst_19 = arith.constant dense<0.000000e+00> : vector<2x1xf32>
    %26 = vector.multi_reduction <add>, %25, %cst_19 [2] : vector<2x1x128xf32> to vector<2x1xf32>
    %27 = vector.shape_cast %26 : vector<2x1xf32> to vector<2x1x1xf32>
    %cst_20 = arith.constant 1.000000e+00 : f32
    %28 = vector.broadcast %cst_20 : f32 to vector<2x1x1xf32>
    %29 = arith.maximumf %27, %28 : vector<2x1x1xf32>
    %30 = arith.truncf %25 : vector<2x1x128xf32> to vector<2x1x128xbf16>
    "tpu.trace_start"() <{level = 10 : i32, message = "bqt,bth->bqh"}> : () -> ()
    %cst_21 = arith.constant dense<0.000000e+00> : vector<2x1x256xf32>
    %31 = tpu.matmul %30, %9, %cst_21 {dimension_numbers = #tpu.dot_dimension_numbers<[2], [1], [1], [2], [0, 0, 0, 1, 1, 2], [0], [0]>} : vector<2x1x128xbf16>, vector<2x128x256xbf16>, vector<2x1x256xf32> -> vector<2x1x256xf32>
    "tpu.trace_stop"() : () -> ()
    %32 = vector.broadcast %29 : vector<2x1x1xf32> to vector<2x1x256xf32>
    %33 = arith.divf %31, %32 : vector<2x1x256xf32>
    %34 = vector.shape_cast %33 : vector<2x1x256xf32> to vector<2x256xf32>
    %35 = arith.truncf %34 : vector<2x256xf32> to vector<2x256xbf16>
    %c0_22 = arith.constant 0 : index
    %c0_23 = arith.constant 0 : index
    %36 = vector.load %arg6[%c0_22, %c0_23] : memref<256x256xbf16, #tpu.memory_space<vmem>>, vector<256x256xbf16>
    %cst_24 = arith.constant dense<0.000000e+00> : vector<2x256xf32>
    %37 = tpu.matmul %35, %36, %cst_24 {dimension_numbers = #tpu.dot_dimension_numbers<[1], [0], [0], [1], [0, 0, 1, 1], [], []>} : vector<2x256xbf16>, vector<256x256xbf16>, vector<2x256xf32> -> vector<2x256xf32>
    %38 = math.tanh %37 : vector<2x256xf32>
    %39 = vector.extract_strided_slice %38 {offsets = [0, 0], sizes = [2, 128], strides = [1, 1]} : vector<2x256xf32> to vector<2x128xf32>
    %40 = vector.shape_cast %39 : vector<2x128xf32> to vector<2x1x128xf32>
    %c0_25 = arith.constant 0 : index
    %c0_26 = arith.constant 0 : index
    %c0_27 = arith.constant 0 : index
    %41 = vector.load %arg9[%c0_25, %c0_26, %c0_27] : memref<2x1x128xf32, #tpu.memory_space<vmem>>, vector<2x1x128xf32>
    tpu.vector_store %arg9[%c0_25, %c0_26, %c0_27], %40 {strides = array<i32>} : memref<2x1x128xf32, #tpu.memory_space<vmem>>, vector<2x1x128xf32>,
    %42 = vector.extract_strided_slice %38 {offsets = [0, 128], sizes = [2, 128], strides = [1, 1]} : vector<2x256xf32> to vector<2x128xf32>
    %43 = vector.shape_cast %42 : vector<2x128xf32> to vector<2x1x128xf32>
    %c0_28 = arith.constant 0 : index
    %c0_29 = arith.constant 0 : index
    %c0_30 = arith.constant 0 : index
    %44 = vector.load %arg10[%c0_28, %c0_29, %c0_30] : memref<2x1x128xf32, #tpu.memory_space<vmem>>, vector<2x1x128xf32>
    tpu.vector_store %arg10[%c0_28, %c0_29, %c0_30], %43 {strides = array<i32>} : memref<2x1x128xf32, #tpu.memory_space<vmem>>, vector<2x1x128xf32>,
    return
  }
  func.func @transform_0(%arg0: i32) -> (i32, i32, i32) {
    %c0_i32 = arith.constant 0 : i32
    %c0_i32_0 = arith.constant 0 : i32
    %c0_i32_1 = arith.constant 0 : i32
    return %arg0, %c0_i32, %c0_i32_0 : i32, i32, i32
  }
  func.func @transform_1(%arg0: i32) -> (i32, i32, i32) {
    %c0_i32 = arith.constant 0 : i32
    %c0_i32_0 = arith.constant 0 : i32
    %c0_i32_1 = arith.constant 0 : i32
    return %arg0, %c0_i32, %c0_i32_0 : i32, i32, i32
  }
  func.func @transform_2(%arg0: i32) -> (i32, i32) {
    %c0_i32 = arith.constant 0 : i32
    %c0_i32_0 = arith.constant 0 : i32
    %c0_i32_1 = arith.constant 0 : i32
    return %c0_i32, %c0_i32_0 : i32, i32
  }
  func.func @transform_3(%arg0: i32) -> (i32, i32) {
    %c0_i32 = arith.constant 0 : i32
    %c0_i32_0 = arith.constant 0 : i32
    %c0_i32_1 = arith.constant 0 : i32
    return %c0_i32, %c0_i32_0 : i32, i32
  }
  func.func @transform_4(%arg0: i32) -> (i32, i32) {
    %c0_i32 = arith.constant 0 : i32
    %c0_i32_0 = arith.constant 0 : i32
    %c0_i32_1 = arith.constant 0 : i32
    return %c0_i32, %c0_i32_0 : i32, i32
  }
  func.func @transform_5(%arg0: i32) -> (i32, i32) {
    %c0_i32 = arith.constant 0 : i32
    %c0_i32_0 = arith.constant 0 : i32
    %c0_i32_1 = arith.constant 0 : i32
    return %c0_i32, %c0_i32_0 : i32, i32
  }
  func.func @transform_6(%arg0: i32) -> (i32, i32, i32) {
    %c0_i32 = arith.constant 0 : i32
    %c0_i32_0 = arith.constant 0 : i32
    %c0_i32_1 = arith.constant 0 : i32
    return %arg0, %c0_i32, %c0_i32_0 : i32, i32, i32
  }
  func.func @transform_7(%arg0: i32) -> (i32, i32, i32) {
    %c0_i32 = arith.constant 0 : i32
    %c0_i32_0 = arith.constant 0 : i32
    %c0_i32_1 = arith.constant 0 : i32
    return %arg0, %c0_i32, %c0_i32_0 : i32, i32, i32
  }
  func.func @transform_8(%arg0: i32) -> (i32, i32, i32) {
    %c0_i32 = arith.constant 0 : i32
    %c0_i32_0 = arith.constant 0 : i32
    %c0_i32_1 = arith.constant 0 : i32
    return %arg0, %c0_i32, %c0_i32_0 : i32, i32, i32
  }
  func.func @transform_9(%arg0: i32) -> (i32, i32, i32) {
    %c0_i32 = arith.constant 0 : i32
    %c0_i32_0 = arith.constant 0 : i32
    %c0_i32_1 = arith.constant 0 : i32
    return %arg0, %c0_i32, %c0_i32_0 : i32, i32, i32
  }
}

</mosaic_0001>

<llo_original>
// kernel: tpu_custom_call.1
$region0: #{tpu_custom_call.1}
  #allocation0 [shape = 'u32[]', space=smem, size = 0x4, offset = 0x4, fixed_abs, tag = 'smem constant byte address 0x4 - core index']
  #allocation1 [shape = 'u32[144,128]{1,0:T(1,128)}', space=vmem, size = 0x12000, scoped, tag = 'internal scratch']
  %s0 = inlined_call_operand.hbm [shape: bf16[2,128,128], index: 0, kind: input, shape index: {}]
  %s1 = inlined_call_operand.vmem [shape: f32[2,1,128], index: 1, kind: input, shape index: {}]
  %s2 = inlined_call_operand.hbm [shape: bf16[128,256], index: 2, kind: input, shape index: {}]
  %s3 = inlined_call_operand.vmem [shape: f32[1,256], index: 3, kind: input, shape index: {}]
  %s4 = inlined_call_operand.vmem [shape: bf16[1,256], index: 4, kind: input, shape index: {}]
  %s5 = inlined_call_operand.hbm [shape: bf16[256,256], index: 5, kind: input, shape index: {}]
  %s6 = inlined_call_operand.hbm [shape: bf16[2,128,256], index: 6, kind: output, shape index: {0}]
  %s7 = inlined_call_operand.hbm [shape: f32[2,1,128], index: 7, kind: output, shape index: {1}]
  %s8 = inlined_call_operand.hbm [shape: f32[2,1,128], index: 8, kind: output, shape index: {2}]
  %s9 = inlined_call_operand.hbm [shape: f32[2,1,128], index: 9, kind: output, shape index: {3}]
  %10 = xla_tuple %s6, %s7, %s8, %s9
  %s11 = sld [smem:[#allocation0]]
  $region70: #{tpu_custom_call.1} parent=0
    _
  %s13 = ssub.s32 1, %s11
  %s14 = scalar_select 0, %s13, %s11
  $region1: #{tpu_custom_call.1} parent=0
    #allocation2 [shape = 'u8[65536]{0}', space=vmem, size = 0x10000, scoped, tag = 'input window, operand 0, single buffered']
    #allocation3 [shape = 's32[1]{0}', space=sflag, size = 0x4, scoped, tag = 'scoped memory for tpu_custom_call.1']
    #allocation4 [shape = 's32[1]{0}', space=sflag, size = 0x4, scoped, tag = 'scoped memory for tpu_custom_call.1']
    #allocation5 [shape = 'u8[65536]{0}', space=vmem, size = 0x10000, scoped, tag = 'input window, operand 2, single buffered']
    #allocation6 [shape = 's32[1]{0}', space=sflag, size = 0x4, scoped, tag = 'scoped memory for tpu_custom_call.1']
    #allocation7 [shape = 'u8[131072]{0}', space=vmem, size = 0x20000, scoped, tag = 'input window, operand 5, single buffered']
    #allocation8 [shape = 'u8[131072]{0}', space=vmem, size = 0x20000, scoped, tag = 'output window, operand 0, single buffered']
    #allocation9 [shape = 'u8[1024]{0}', space=vmem, size = 0x400, scoped, tag = 'output window, operand 1, single buffered']
    #allocation10 [shape = 's32[1]{0}', space=sflag, size = 0x4, scoped, tag = 'scoped memory for tpu_custom_call.1']
    #allocation11 [shape = 'u8[1024]{0}', space=vmem, size = 0x400, scoped, tag = 'output window, operand 2, single buffered']
    #allocation12 [shape = 'u8[1024]{0}', space=vmem, size = 0x400, scoped, tag = 'output window, operand 3, single buffered']
    #allocation13 [shape = 's32[1]{0}', space=sflag, size = 0x4, scoped, tag = 'scoped memory for tpu_custom_call.1']
    %15 = vsyncpa [#allocation3], 0
    %16 = vsyncpa [#allocation6], 0
    %17 = vsyncpa [#allocation4], 0
    %18 = vsyncpa [#allocation10], 0
    %19 = vsyncpa [#allocation13], 0
    // Predicated region
    $region2: #{tpu_custom_call.1} parent=1 // pred_check
      _
    $region3: #{tpu_custom_call.1} parent=1 // pred_check_branch
      %21 = sbr.rel (0) target = $region5
    $region4: #{tpu_custom_call.1} parent=1 // pred_region
      %s23 = ssub.s32 2048, 2048
      %24 = vsyncadd [#allocation3], %s23
      %s25 = sshll.u32 [#allocation2], 4
      %s26 = int_to_ptr.vmem [resolvable:$true] %s25
      %31 = dma.hbm_to_vmem [thread:$0]  %s0, 2048, %s26, [#allocation3], 64, 64, 4
    $region5: #{tpu_custom_call.1} parent=1 // pred_fallthru
      _
    // Predicated region
    $region6: #{tpu_custom_call.1} parent=1 // pred_check
      _
    $region7: #{tpu_custom_call.1} parent=1 // pred_check_branch
      %33 = sbr.rel (0) target = $region9
    $region8: #{tpu_custom_call.1} parent=1 // pred_region
      _
    $region9: #{tpu_custom_call.1} parent=1 // pred_fallthru
      _
    // Predicated region
    $region10: #{tpu_custom_call.1} parent=1 // pred_check
      _
    $region11: #{tpu_custom_call.1} parent=1 // pred_check_branch
      %35 = sbr.rel (0) target = $region13
    $region12: #{tpu_custom_call.1} parent=1 // pred_region
      %s37 = ssub.s32 2048, 2048
      %38 = vsyncadd [#allocation6], %s37
      %s39 = sshll.u32 [#allocation5], 4
      %s40 = int_to_ptr.vmem [resolvable:$true] %s39
      %45 = dma.hbm_to_vmem [thread:$0]  %s2, 2048, %s40, [#allocation6], 128, 128, 8
    $region13: #{tpu_custom_call.1} parent=1 // pred_fallthru
      _
    // Predicated region
    $region14: #{tpu_custom_call.1} parent=1 // pred_check
      _
    $region15: #{tpu_custom_call.1} parent=1 // pred_check_branch
      %47 = sbr.rel (0) target = $region17
    $region16: #{tpu_custom_call.1} parent=1 // pred_region
      _
    $region17: #{tpu_custom_call.1} parent=1 // pred_fallthru
      _
    // Predicated region
    $region18: #{tpu_custom_call.1} parent=1 // pred_check
      _
    $region19: #{tpu_custom_call.1} parent=1 // pred_check_branch
      %49 = sbr.rel (0) target = $region21
    $region20: #{tpu_custom_call.1} parent=1 // pred_region
      _
    $region21: #{tpu_custom_call.1} parent=1 // pred_fallthru
      _
    // Predicated region
    $region22: #{tpu_custom_call.1} parent=1 // pred_check
      _
    $region23: #{tpu_custom_call.1} parent=1 // pred_check_branch
      %51 = sbr.rel (0) target = $region25
    $region24: #{tpu_custom_call.1} parent=1 // pred_region
      %s53 = ssub.s32 4096, 4096
      %54 = vsyncadd [#allocation6], %s53
      %s55 = sshll.u32 [#allocation7], 4
      %s56 = int_to_ptr.vmem [resolvable:$true] %s55
      %61 = dma.hbm_to_vmem [thread:$0]  %s5, 4096, %s56, [#allocation6], 128, 128, 8
    $region25: #{tpu_custom_call.1} parent=1 // pred_fallthru
      _
    // Predicated region
    $region26: #{tpu_custom_call.1} parent=1 // pred_check
      _
    $region27: #{tpu_custom_call.1} parent=1 // pred_check_branch
      %63 = sbr.rel (0) target = $region29
    $region28: #{tpu_custom_call.1} parent=1 // pred_region
      %64 = dma.done [#allocation3], 2048
    $region29: #{tpu_custom_call.1} parent=1 // pred_fallthru
      _
    // Predicated region
    $region30: #{tpu_custom_call.1} parent=1 // pred_check
      _
    $region31: #{tpu_custom_call.1} parent=1 // pred_check_branch
      %66 = sbr.rel (0) target = $region33
    $region32: #{tpu_custom_call.1} parent=1 // pred_region
      %67 = dma.done [#allocation6], 2048
    $region33: #{tpu_custom_call.1} parent=1 // pred_fallthru
      _
    // Predicated region
    $region34: #{tpu_custom_call.1} parent=1 // pred_check
      _
    $region35: #{tpu_custom_call.1} parent=1 // pred_check_branch
      %69 = sbr.rel (0) target = $region37
    $region36: #{tpu_custom_call.1} parent=1 // pred_region
      %70 = dma.done [#allocation6], 4096
    $region37: #{tpu_custom_call.1} parent=1 // pred_fallthru
      _
    %v72 = vld [vmem:[#allocation2] sm:$0xf]
    %v73 = vld [vmem:[#allocation2 + $0x4] sm:$0xf]
    %v74 = vld [vmem:[#allocation2 + $0x8] sm:$0xf]
    %v75 = vld [vmem:[#allocation2 + $0xc] sm:$0xf]
    %v76 = vld [vmem:[#allocation2 + $0x10] sm:$0xf]
    %v77 = vld [vmem:[#allocation2 + $0x14] sm:$0xf]
    %v78 = vld [vmem:[#allocation2 + $0x18] sm:$0xf]
    %v79 = vld [vmem:[#allocation2 + $0x1c] sm:$0xf]
    %v80 = vld [vmem:[#allocation2 + $0x20] sm:$0xf]
    %v81 = vld [vmem:[#allocation2 + $0x24] sm:$0xf]
    %v82 = vld [vmem:[#allocation2 + $0x28] sm:$0xf]
    %v83 = vld [vmem:[#allocation2 + $0x2c] sm:$0xf]
    %v84 = vld [vmem:[#allocation2 + $0x30] sm:$0xf]
    %v85 = vld [vmem:[#allocation2 + $0x34] sm:$0xf]
    %v86 = vld [vmem:[#allocation2 + $0x38] sm:$0xf]
    %v87 = vld [vmem:[#allocation2 + $0x3c] sm:$0xf]
    %v88 = vld [vmem:[#allocation2 + $0x40] sm:$0xf]
    %v89 = vld [vmem:[#allocation2 + $0x44] sm:$0xf]
    %v90 = vld [vmem:[#allocation2 + $0x48] sm:$0xf]
    %v91 = vld [vmem:[#allocation2 + $0x4c] sm:$0xf]
    %v92 = vld [vmem:[#allocation2 + $0x50] sm:$0xf]
    %v93 = vld [vmem:[#allocation2 + $0x54] sm:$0xf]
    %v94 = vld [vmem:[#allocation2 + $0x58] sm:$0xf]
    %v95 = vld [vmem:[#allocation2 + $0x5c] sm:$0xf]
    %v96 = vld [vmem:[#allocation2 + $0x60] sm:$0xf]
    %v97 = vld [vmem:[#allocation2 + $0x64] sm:$0xf]
    %v98 = vld [vmem:[#allocation2 + $0x68] sm:$0xf]
    %v99 = vld [vmem:[#allocation2 + $0x6c] sm:$0xf]
    %v100 = vld [vmem:[#allocation2 + $0x70] sm:$0xf]
    %v101 = vld [vmem:[#allocation2 + $0x74] sm:$0xf]
    %v102 = vld [vmem:[#allocation2 + $0x78] sm:$0xf]
    %v103 = vld [vmem:[#allocation2 + $0x7c] sm:$0xf]
    %v104 = vld [vmem:[#allocation5] sm:$0xff]
    %v105 = vld [vmem:[#allocation5 + $0x8] sm:$0xff]
    %v106 = vld [vmem:[#allocation5 + $0x10] sm:$0xff]
    %v107 = vld [vmem:[#allocation5 + $0x18] sm:$0xff]
    %v108 = vld [vmem:[#allocation5 + $0x20] sm:$0xff]
    %v109 = vld [vmem:[#allocation5 + $0x28] sm:$0xff]
    %v110 = vld [vmem:[#allocation5 + $0x30] sm:$0xff]
    %v111 = vld [vmem:[#allocation5 + $0x38] sm:$0xff]
    %v112 = vld [vmem:[#allocation5 + $0x40] sm:$0xff]
    %v113 = vld [vmem:[#allocation5 + $0x48] sm:$0xff]
    %v114 = vld [vmem:[#allocation5 + $0x50] sm:$0xff]
    %v115 = vld [vmem:[#allocation5 + $0x58] sm:$0xff]
    %v116 = vld [vmem:[#allocation5 + $0x60] sm:$0xff]
    %v117 = vld [vmem:[#allocation5 + $0x68] sm:$0xff]
    %v118 = vld [vmem:[#allocation5 + $0x70] sm:$0xff]
    %v119 = vld [vmem:[#allocation5 + $0x78] sm:$0xff]
    %v120 = vld [vmem:[%s3] sm:$0x3]
    %v122 = vlaneseq
    %v123 = vshrl.u32 %v122, 7
    %v124 = vsub.s32 0, %v123
    %v125 = vrot.slane %v120, %v124
    %v126 = vlaneseq
    %v127 = vshrl.u32 %v126, 7
    %v128 = vsub.s32 1, %v127
    %v129 = vrot.slane %v120, %v128
    %v164 = vunpack.c.l.b16 %v72
    %v165 = vunpack.c.l.b16 %v73
    %v166 = vunpack.c.l.b16 %v74
    %v167 = vunpack.c.l.b16 %v75
    %v168 = vunpack.c.l.b16 %v76
    %v169 = vunpack.c.l.b16 %v77
    %v170 = vunpack.c.l.b16 %v78
    %v171 = vunpack.c.l.b16 %v79
    %v172 = vunpack.c.l.b16 %v80
    %v173 = vunpack.c.l.b16 %v81
    %v174 = vunpack.c.l.b16 %v82
    %v175 = vunpack.c.l.b16 %v83
    %v176 = vunpack.c.l.b16 %v84
    %v177 = vunpack.c.l.b16 %v85
    %v178 = vunpack.c.l.b16 %v86
    %v179 = vunpack.c.l.b16 %v87
    %v180 = vunpack.c.l.b16 %v88
    %v181 = vunpack.c.l.b16 %v89
    %v182 = vunpack.c.l.b16 %v90
    %v183 = vunpack.c.l.b16 %v91
    %v184 = vunpack.c.l.b16 %v92
    %v185 = vunpack.c.l.b16 %v93
    %v186 = vunpack.c.l.b16 %v94
    %v187 = vunpack.c.l.b16 %v95
    %v188 = vunpack.c.l.b16 %v96
    %v189 = vunpack.c.l.b16 %v97
    %v190 = vunpack.c.l.b16 %v98
    %v191 = vunpack.c.l.b16 %v99
    %v192 = vunpack.c.l.b16 %v100
    %v193 = vunpack.c.l.b16 %v101
    %v194 = vunpack.c.l.b16 %v102
    %v195 = vunpack.c.l.b16 %v103
    %v196 = vpack.c.b16 %v165, %v164
    %v197 = vpack.c.b16 %v167, %v166
    %v198 = vpack.c.b16 %v169, %v168
    %v199 = vpack.c.b16 %v171, %v170
    %v200 = vpack.c.b16 %v173, %v172
    %v201 = vpack.c.b16 %v175, %v174
    %v202 = vpack.c.b16 %v177, %v176
    %v203 = vpack.c.b16 %v179, %v178
    %v204 = vpack.c.b16 %v181, %v180
    %v205 = vpack.c.b16 %v183, %v182
    %v206 = vpack.c.b16 %v185, %v184
    %v207 = vpack.c.b16 %v187, %v186
    %v208 = vpack.c.b16 %v189, %v188
    %v209 = vpack.c.b16 %v191, %v190
    %v210 = vpack.c.b16 %v193, %v192
    %v211 = vpack.c.b16 %v195, %v194
    %v244 = vunpack.c.l.b16 %v104
    %v245 = vunpack.c.h.b16 %v104
    %v246 = vunpack.c.l.b16 %v105
    %v247 = vunpack.c.h.b16 %v105
    %v248 = vunpack.c.l.b16 %v106
    %v249 = vunpack.c.h.b16 %v106
    %v250 = vunpack.c.l.b16 %v107
    %v251 = vunpack.c.h.b16 %v107
    %v252 = vunpack.c.l.b16 %v108
    %v253 = vunpack.c.h.b16 %v108
    %v254 = vunpack.c.l.b16 %v109
    %v255 = vunpack.c.h.b16 %v109
    %v256 = vunpack.c.l.b16 %v110
    %v257 = vunpack.c.h.b16 %v110
    %v258 = vunpack.c.l.b16 %v111
    %v259 = vunpack.c.h.b16 %v111
    %v260 = vunpack.c.l.b16 %v112
    %v261 = vunpack.c.h.b16 %v112
    %v262 = vunpack.c.l.b16 %v113
    %v263 = vunpack.c.h.b16 %v113
    %v264 = vunpack.c.l.b16 %v114
    %v265 = vunpack.c.h.b16 %v114
    %v266 = vunpack.c.l.b16 %v115
    %v267 = vunpack.c.h.b16 %v115
    %v268 = vunpack.c.l.b16 %v116
    %v269 = vunpack.c.h.b16 %v116
    %v270 = vunpack.c.l.b16 %v117
    %v271 = vunpack.c.h.b16 %v117
    %v272 = vunpack.c.l.b16 %v118
    %v273 = vunpack.c.h.b16 %v118
    %v274 = vunpack.c.l.b16 %v119
    %v275 = vunpack.c.h.b16 %v119
    %v276 = vpack.c.b16 %v246, %v244
    %v277 = vpack.c.b16 %v247, %v245
    %v278 = vpack.c.b16 %v250, %v248
    %v279 = vpack.c.b16 %v251, %v249
    %v280 = vpack.c.b16 %v254, %v252
    %v281 = vpack.c.b16 %v255, %v253
    %v282 = vpack.c.b16 %v258, %v256
    %v283 = vpack.c.b16 %v259, %v257
    %v284 = vpack.c.b16 %v262, %v260
    %v285 = vpack.c.b16 %v263, %v261
    %v286 = vpack.c.b16 %v266, %v264
    %v287 = vpack.c.b16 %v267, %v265
    %v288 = vpack.c.b16 %v270, %v268
    %v289 = vpack.c.b16 %v271, %v269
    %v290 = vpack.c.b16 %v274, %v272
    %v291 = vpack.c.b16 %v275, %v273
    %308 = vmatprep.subr.bf16.mxu0 %v277
    %309 = vmatpush1.bf16.msra.mxu0 %v276
    %310 = vmatprep.subr.bf16.mxu0 %v279
    %311 = vmatpush1.bf16.msra.mxu0 %v278
    %312 = vmatprep.subr.bf16.mxu0 %v281
    %313 = vmatpush1.bf16.msra.mxu0 %v280
    %314 = vmatprep.subr.bf16.mxu0 %v283
    %315 = vmatpush1.bf16.msra.mxu0 %v282
    %316 = vmatprep.subr.bf16.mxu0 %v285
    %317 = vmatpush1.bf16.msra.mxu0 %v284
    %318 = vmatprep.subr.bf16.mxu0 %v287
    %319 = vmatpush1.bf16.msra.mxu0 %v286
    %320 = vmatprep.subr.bf16.mxu0 %v289
    %321 = vmatpush1.bf16.msra.mxu0 %v288
    %322 = vmatprep.subr.bf16.mxu0 %v291
    %323 = vmatpush1.bf16.msra.mxu0 %v290
    %324 = vmatprep.subr.bf16.mxu0 0
    %325 = vmatpush1.bf16.msra.mxu0 0
    %326 = vmatprep.subr.bf16.mxu0 0
    %327 = vmatpush1.bf16.msra.mxu0 0
    %328 = vmatprep.subr.bf16.mxu0 0
    %329 = vmatpush1.bf16.msra.mxu0 0
    %330 = vmatprep.subr.bf16.mxu0 0
    %331 = vmatpush1.bf16.msra.mxu0 0
    %332 = vmatprep.subr.bf16.mxu0 0
    %333 = vmatpush1.bf16.msra.mxu0 0
    %334 = vmatprep.subr.bf16.mxu0 0
    %335 = vmatpush1.bf16.msra.mxu0 0
    %336 = vmatprep.subr.bf16.mxu0 0
    %337 = vmatpush1.bf16.msra.mxu0 0
    %338 = vmatprep.subr.bf16.mxu0 0
    %339 = vmatpush1.bf16.msra.mxu0 0
    %340 = vmatprep.mubr.bf16.mxu0 0
    %341 = vmatmul.mubr.bf16.gmra.mrb[0].mxu0 %v196
    %v342 = vpop.f32.mrb[0].mxu0
    %v343 = vadd.f32 %v125, %v342
    %v344 = vpop.f32.mrb[0].mxu0
    %v345 = vadd.f32 %v129, %v344
    %v346 = vpop.f32.mrb[0].mxu0
    %v347 = vadd.f32 %v125, %v346
    %v348 = vpop.f32.mrb[0].mxu0
    %v349 = vadd.f32 %v129, %v348
    %350 = vmatprep.mubr.bf16.mxu0 0
    %351 = vmatmul.mubr.bf16.gmra.mrb[0].mxu0 %v197
    %v352 = vpop.f32.mrb[0].mxu0
    %v353 = vadd.f32 %v125, %v352
    %v354 = vpop.f32.mrb[0].mxu0
    %v355 = vadd.f32 %v129, %v354
    %v356 = vpop.f32.mrb[0].mxu0
    %v357 = vadd.f32 %v125, %v356
    %v358 = vpop.f32.mrb[0].mxu0
    %v359 = vadd.f32 %v129, %v358
    %360 = vmatprep.mubr.bf16.mxu0 0
    %361 = vmatmul.mubr.bf16.gmra.mrb[0].mxu0 %v198
    %v362 = vpop.f32.mrb[0].mxu0
    %v363 = vadd.f32 %v125, %v362
    %v364 = vpop.f32.mrb[0].mxu0
    %v365 = vadd.f32 %v129, %v364
    %v366 = vpop.f32.mrb[0].mxu0
    %v367 = vadd.f32 %v125, %v366
    %v368 = vpop.f32.mrb[0].mxu0
    %v369 = vadd.f32 %v129, %v368
    %370 = vmatprep.mubr.bf16.mxu0 0
    %371 = vmatmul.mubr.bf16.gmra.mrb[0].mxu0 %v199
    %v372 = vpop.f32.mrb[0].mxu0
    %v373 = vadd.f32 %v125, %v372
    %v374 = vpop.f32.mrb[0].mxu0
    %v375 = vadd.f32 %v129, %v374
    %v376 = vpop.f32.mrb[0].mxu0
    %v377 = vadd.f32 %v125, %v376
    %v378 = vpop.f32.mrb[0].mxu0
    %v379 = vadd.f32 %v129, %v378
    %380 = vmatprep.mubr.bf16.mxu0 0
    %381 = vmatmul.mubr.bf16.gmra.mrb[0].mxu0 %v200
    %v382 = vpop.f32.mrb[0].mxu0
    %v383 = vadd.f32 %v125, %v382
    %v384 = vpop.f32.mrb[0].mxu0
    %v385 = vadd.f32 %v129, %v384
    %v386 = vpop.f32.mrb[0].mxu0
    %v387 = vadd.f32 %v125, %v386
    %v388 = vpop.f32.mrb[0].mxu0
    %v389 = vadd.f32 %v129, %v388
    %390 = vmatprep.mubr.bf16.mxu0 0
    %391 = vmatmul.mubr.bf16.gmra.mrb[0].mxu0 %v201
    %v392 = vpop.f32.mrb[0].mxu0
    %v393 = vadd.f32 %v125, %v392
    %v394 = vpop.f32.mrb[0].mxu0
    %v395 = vadd.f32 %v129, %v394
    %v396 = vpop.f32.mrb[0].mxu0
    %v397 = vadd.f32 %v125, %v396
    %v398 = vpop.f32.mrb[0].mxu0
    %v399 = vadd.f32 %v129, %v398
    %400 = vmatprep.mubr.bf16.mxu0 0
    %401 = vmatmul.mubr.bf16.gmra.mrb[0].mxu0 %v202
    %v402 = vpop.f32.mrb[0].mxu0
    %v403 = vadd.f32 %v125, %v402
    %v404 = vpop.f32.mrb[0].mxu0
    %v405 = vadd.f32 %v129, %v404
    %v406 = vpop.f32.mrb[0].mxu0
    %v407 = vadd.f32 %v125, %v406
    %v408 = vpop.f32.mrb[0].mxu0
    %v409 = vadd.f32 %v129, %v408
    %410 = vmatprep.mubr.bf16.mxu0 0
    %411 = vmatmul.mubr.bf16.gmra.mrb[0].mxu0 %v203
    %v412 = vpop.f32.mrb[0].mxu0
    %v413 = vadd.f32 %v125, %v412
    %v414 = vpop.f32.mrb[0].mxu0
    %v415 = vadd.f32 %v129, %v414
    %v416 = vpop.f32.mrb[0].mxu0
    %v417 = vadd.f32 %v125, %v416
    %v418 = vpop.f32.mrb[0].mxu0
    %v419 = vadd.f32 %v129, %v418
    %420 = vmatprep.mubr.bf16.mxu0 0
    %421 = vmatmul.mubr.bf16.gmra.mrb[0].mxu0 %v204
    %v422 = vpop.f32.mrb[0].mxu0
    %v423 = vadd.f32 %v125, %v422
    %v424 = vpop.f32.mrb[0].mxu0
    %v425 = vadd.f32 %v129, %v424
    %v426 = vpop.f32.mrb[0].mxu0
    %v427 = vadd.f32 %v125, %v426
    %v428 = vpop.f32.mrb[0].mxu0
    %v429 = vadd.f32 %v129, %v428
    %430 = vmatprep.mubr.bf16.mxu0 0
    %431 = vmatmul.mubr.bf16.gmra.mrb[0].mxu0 %v205
    %v432 = vpop.f32.mrb[0].mxu0
    %v433 = vadd.f32 %v125, %v432
    %v434 = vpop.f32.mrb[0].mxu0
    %v435 = vadd.f32 %v129, %v434
    %v436 = vpop.f32.mrb[0].mxu0
    %v437 = vadd.f32 %v125, %v436
    %v438 = vpop.f32.mrb[0].mxu0
    %v439 = vadd.f32 %v129, %v438
    %440 = vmatprep.mubr.bf16.mxu0 0
    %441 = vmatmul.mubr.bf16.gmra.mrb[0].mxu0 %v206
    %v442 = vpop.f32.mrb[0].mxu0
    %v443 = vadd.f32 %v125, %v442
    %v444 = vpop.f32.mrb[0].mxu0
    %v445 = vadd.f32 %v129, %v444
    %v446 = vpop.f32.mrb[0].mxu0
    %v447 = vadd.f32 %v125, %v446
    %v448 = vpop.f32.mrb[0].mxu0
    %v449 = vadd.f32 %v129, %v448
    %450 = vmatprep.mubr.bf16.mxu0 0
    %451 = vmatmul.mubr.bf16.gmra.mrb[0].mxu0 %v207
    %v452 = vpop.f32.mrb[0].mxu0
    %v453 = vadd.f32 %v125, %v452
    %v454 = vpop.f32.mrb[0].mxu0
    %v455 = vadd.f32 %v129, %v454
    %v456 = vpop.f32.mrb[0].mxu0
    %v457 = vadd.f32 %v125, %v456
    %v458 = vpop.f32.mrb[0].mxu0
    %v459 = vadd.f32 %v129, %v458
    %460 = vmatprep.mubr.bf16.mxu0 0
    %461 = vmatmul.mubr.bf16.gmra.mrb[0].mxu0 %v208
    %v462 = vpop.f32.mrb[0].mxu0
    %v463 = vadd.f32 %v125, %v462
    %v464 = vpop.f32.mrb[0].mxu0
    %v465 = vadd.f32 %v129, %v464
    %v466 = vpop.f32.mrb[0].mxu0
    %v467 = vadd.f32 %v125, %v466
    %v468 = vpop.f32.mrb[0].mxu0
    %v469 = vadd.f32 %v129, %v468
    %470 = vmatprep.mubr.bf16.mxu0 0
    %471 = vmatmul.mubr.bf16.gmra.mrb[0].mxu0 %v209
    %v472 = vpop.f32.mrb[0].mxu0
    %v473 = vadd.f32 %v125, %v472
    %v474 = vpop.f32.mrb[0].mxu0
    %v475 = vadd.f32 %v129, %v474
    %v476 = vpop.f32.mrb[0].mxu0
    %v477 = vadd.f32 %v125, %v476
    %v478 = vpop.f32.mrb[0].mxu0
    %v479 = vadd.f32 %v129, %v478
    %480 = vmatprep.mubr.bf16.mxu0 0
    %481 = vmatmul.mubr.bf16.gmra.mrb[0].mxu0 %v210
    %v482 = vpop.f32.mrb[0].mxu0
    %v483 = vadd.f32 %v125, %v482
    %v484 = vpop.f32.mrb[0].mxu0
    %v485 = vadd.f32 %v129, %v484
    %v486 = vpop.f32.mrb[0].mxu0
    %v487 = vadd.f32 %v125, %v486
    %v488 = vpop.f32.mrb[0].mxu0
    %v489 = vadd.f32 %v129, %v488
    %490 = vmatprep.mubr.bf16.mxu0 0
    %491 = vmatmul.mubr.bf16.gmra.mrb[0].mxu0 %v211
    %v492 = vpop.f32.mrb[0].mxu0
    %v493 = vadd.f32 %v125, %v492
    %v494 = vpop.f32.mrb[0].mxu0
    %v495 = vadd.f32 %v129, %v494
    %v496 = vpop.f32.mrb[0].mxu0
    %v497 = vadd.f32 %v125, %v496
    %v498 = vpop.f32.mrb[0].mxu0
    %v499 = vadd.f32 %v129, %v498
    %500 = vdwg.mxu0
    %v501 = vtanh.pop %v343
    %v502 = vtanh.pop %v345
    %v503 = vtanh.pop %v347
    %v504 = vtanh.pop %v349
    %v505 = vtanh.pop %v353
    %v506 = vtanh.pop %v355
    %v507 = vtanh.pop %v357
    %v508 = vtanh.pop %v359
    %v509 = vtanh.pop %v363
    %v510 = vtanh.pop %v365
    %v511 = vtanh.pop %v367
    %v512 = vtanh.pop %v369
    %v513 = vtanh.pop %v373
    %v514 = vtanh.pop %v375
    %v515 = vtanh.pop %v377
    %v516 = vtanh.pop %v379
    %v517 = vtanh.pop %v383
    %v518 = vtanh.pop %v385
    %v519 = vtanh.pop %v387
    %v520 = vtanh.pop %v389
    %v521 = vtanh.pop %v393
    %v522 = vtanh.pop %v395
    %v523 = vtanh.pop %v397
    %v524 = vtanh.pop %v399
    %v525 = vtanh.pop %v403
    %v526 = vtanh.pop %v405
    %v527 = vtanh.pop %v407
    %v528 = vtanh.pop %v409
    %v529 = vtanh.pop %v413
    %v530 = vtanh.pop %v415
    %v531 = vtanh.pop %v417
    %v532 = vtanh.pop %v419
    %v533 = vtanh.pop %v423
    %v534 = vtanh.pop %v425
    %v535 = vtanh.pop %v427
    %v536 = vtanh.pop %v429
    %v537 = vtanh.pop %v433
    %v538 = vtanh.pop %v435
    %v539 = vtanh.pop %v437
    %v540 = vtanh.pop %v439
    %v541 = vtanh.pop %v443
    %v542 = vtanh.pop %v445
    %v543 = vtanh.pop %v447
    %v544 = vtanh.pop %v449
    %v545 = vtanh.pop %v453
    %v546 = vtanh.pop %v455
    %v547 = vtanh.pop %v457
    %v548 = vtanh.pop %v459
    %v549 = vtanh.pop %v463
    %v550 = vtanh.pop %v465
    %v551 = vtanh.pop %v467
    %v552 = vtanh.pop %v469
    %v553 = vtanh.pop %v473
    %v554 = vtanh.pop %v475
    %v555 = vtanh.pop %v477
    %v556 = vtanh.pop %v479
    %v557 = vtanh.pop %v483
    %v558 = vtanh.pop %v485
    %v559 = vtanh.pop %v487
    %v560 = vtanh.pop %v489
    %v561 = vtanh.pop %v493
    %v562 = vtanh.pop %v495
    %v563 = vtanh.pop %v497
    %v564 = vtanh.pop %v499
    %v565 = vpack.c.bf16 %v503, %v501
    %v566 = vpack.c.bf16 %v504, %v502
    %v567 = vpack.c.bf16 %v507, %v505
    %v568 = vpack.c.bf16 %v508, %v506
    %v569 = vpack.c.bf16 %v511, %v509
    %v570 = vpack.c.bf16 %v512, %v510
    %v571 = vpack.c.bf16 %v515, %v513
    %v572 = vpack.c.bf16 %v516, %v514
    %v573 = vpack.c.bf16 %v519, %v517
    %v574 = vpack.c.bf16 %v520, %v518
    %v575 = vpack.c.bf16 %v523, %v521
    %v576 = vpack.c.bf16 %v524, %v522
    %v577 = vpack.c.bf16 %v527, %v525
    %v578 = vpack.c.bf16 %v528, %v526
    %v579 = vpack.c.bf16 %v531, %v529
    %v580 = vpack.c.bf16 %v532, %v530
    %v581 = vpack.c.bf16 %v535, %v533
    %v582 = vpack.c.bf16 %v536, %v534
    %v583 = vpack.c.bf16 %v539, %v537
    %v584 = vpack.c.bf16 %v540, %v538
    %v585 = vpack.c.bf16 %v543, %v541
    %v586 = vpack.c.bf16 %v544, %v542
    %v587 = vpack.c.bf16 %v547, %v545
    %v588 = vpack.c.bf16 %v548, %v546
    %v589 = vpack.c.bf16 %v551, %v549
    %v590 = vpack.c.bf16 %v552, %v550
    %v591 = vpack.c.bf16 %v555, %v553
    %v592 = vpack.c.bf16 %v556, %v554
    %v593 = vpack.c.bf16 %v559, %v557
    %v594 = vpack.c.bf16 %v560, %v558
    %v595 = vpack.c.bf16 %v563, %v561
    %v596 = vpack.c.bf16 %v564, %v562
    %v629 = vunpack.c.l.b16 %v565
    %v630 = vunpack.c.l.b16 %v566
    %v631 = vunpack.c.h.b16 %v565
    %v632 = vunpack.c.h.b16 %v566
    %v633 = vunpack.c.l.b16 %v567
    %v634 = vunpack.c.l.b16 %v568
    %v635 = vunpack.c.h.b16 %v567
    %v636 = vunpack.c.h.b16 %v568
    %v637 = vunpack.c.l.b16 %v569
    %v638 = vunpack.c.l.b16 %v570
    %v639 = vunpack.c.h.b16 %v569
    %v640 = vunpack.c.h.b16 %v570
    %v641 = vunpack.c.l.b16 %v571
    %v642 = vunpack.c.l.b16 %v572
    %v643 = vunpack.c.h.b16 %v571
    %v644 = vunpack.c.h.b16 %v572
    %v645 = vunpack.c.l.b16 %v573
    %v646 = vunpack.c.l.b16 %v574
    %v647 = vunpack.c.h.b16 %v573
    %v648 = vunpack.c.h.b16 %v574
    %v649 = vunpack.c.l.b16 %v575
    %v650 = vunpack.c.l.b16 %v576
    %v651 = vunpack.c.h.b16 %v575
    %v652 = vunpack.c.h.b16 %v576
    %v653 = vunpack.c.l.b16 %v577
    %v654 = vunpack.c.l.b16 %v578
    %v655 = vunpack.c.h.b16 %v577
    %v656 = vunpack.c.h.b16 %v578
    %v657 = vunpack.c.l.b16 %v579
    %v658 = vunpack.c.l.b16 %v580
    %v659 = vunpack.c.h.b16 %v579
    %v660 = vunpack.c.h.b16 %v580
    %v661 = vunpack.c.l.b16 %v581
    %v662 = vunpack.c.l.b16 %v582
    %v663 = vunpack.c.h.b16 %v581
    %v664 = vunpack.c.h.b16 %v582
    %v665 = vunpack.c.l.b16 %v583
    %v666 = vunpack.c.l.b16 %v584
    %v667 = vunpack.c.h.b16 %v583
    %v668 = vunpack.c.h.b16 %v584
    %v669 = vunpack.c.l.b16 %v585
    %v670 = vunpack.c.l.b16 %v586
    %v671 = vunpack.c.h.b16 %v585
    %v672 = vunpack.c.h.b16 %v586
    %v673 = vunpack.c.l.b16 %v587
    %v674 = vunpack.c.l.b16 %v588
    %v675 = vunpack.c.h.b16 %v587
    %v676 = vunpack.c.h.b16 %v588
    %v677 = vunpack.c.l.b16 %v589
    %v678 = vunpack.c.l.b16 %v590
    %v679 = vunpack.c.h.b16 %v589
    %v680 = vunpack.c.h.b16 %v590
    %v681 = vunpack.c.l.b16 %v591
    %v682 = vunpack.c.l.b16 %v592
    %v683 = vunpack.c.h.b16 %v591
    %v684 = vunpack.c.h.b16 %v592
    %v685 = vunpack.c.l.b16 %v593
    %v686 = vunpack.c.l.b16 %v594
    %v687 = vunpack.c.h.b16 %v593
    %v688 = vunpack.c.h.b16 %v594
    %v689 = vunpack.c.l.b16 %v595
    %v690 = vunpack.c.l.b16 %v596
    %v691 = vunpack.c.h.b16 %v595
    %v692 = vunpack.c.h.b16 %v596
    %v693 = vpack.c.b16 %v630, %v629
    %v694 = vpack.c.b16 %v632, %v631
    %v695 = vpack.c.b16 %v634, %v633
    %v696 = vpack.c.b16 %v636, %v635
    %v697 = vpack.c.b16 %v638, %v637
    %v698 = vpack.c.b16 %v640, %v639
    %v699 = vpack.c.b16 %v642, %v641
    %v700 = vpack.c.b16 %v644, %v643
    %v701 = vpack.c.b16 %v646, %v645
    %v702 = vpack.c.b16 %v648, %v647
    %v703 = vpack.c.b16 %v650, %v649
    %v704 = vpack.c.b16 %v652, %v651
    %v705 = vpack.c.b16 %v654, %v653
    %v706 = vpack.c.b16 %v656, %v655
    %v707 = vpack.c.b16 %v658, %v657
    %v708 = vpack.c.b16 %v660, %v659
    %v709 = vpack.c.b16 %v662, %v661
    %v710 = vpack.c.b16 %v664, %v663
    %v711 = vpack.c.b16 %v666, %v665
    %v712 = vpack.c.b16 %v668, %v667
    %v713 = vpack.c.b16 %v670, %v669
    %v714 = vpack.c.b16 %v672, %v671
    %v715 = vpack.c.b16 %v674, %v673
    %v716 = vpack.c.b16 %v676, %v675
    %v717 = vpack.c.b16 %v678, %v677
    %v718 = vpack.c.b16 %v680, %v679
    %v719 = vpack.c.b16 %v682, %v681
    %v720 = vpack.c.b16 %v684, %v683
    %v721 = vpack.c.b16 %v686, %v685
    %v722 = vpack.c.b16 %v688, %v687
    %v723 = vpack.c.b16 %v690, %v689
    %v724 = vpack.c.b16 %v692, %v691
    %757 = vst [vmem:[#allocation8] sm:$0xff] %v693
    %758 = vst [vmem:[#allocation8 + $0x8] sm:$0xff] %v694
    %759 = vst [vmem:[#allocation8 + $0x10] sm:$0xff] %v695
    %760 = vst [vmem:[#allocation8 + $0x18] sm:$0xff] %v696
    %761 = vst [vmem:[#allocation8 + $0x20] sm:$0xff] %v697
    %762 = vst [vmem:[#allocation8 + $0x28] sm:$0xff] %v698
    %763 = vst [vmem:[#allocation8 + $0x30] sm:$0xff] %v699
    %764 = vst [vmem:[#allocation8 + $0x38] sm:$0xff] %v700
    %765 = vst [vmem:[#allocation8 + $0x40] sm:$0xff] %v701
    %766 = vst [vmem:[#allocation8 + $0x48] sm:$0xff] %v702
    %767 = vst [vmem:[#allocation8 + $0x50] sm:$0xff] %v703
    %768 = vst [vmem:[#allocation8 + $0x58] sm:$0xff] %v704
    %769 = vst [vmem:[#allocation8 + $0x60] sm:$0xff] %v705
    %770 = vst [vmem:[#allocation8 + $0x68] sm:$0xff] %v706
    %771 = vst [vmem:[#allocation8 + $0x70] sm:$0xff] %v707
    %772 = vst [vmem:[#allocation8 + $0x78] sm:$0xff] %v708
    %773 = vst [vmem:[#allocation8 + $0x80] sm:$0xff] %v709
    %774 = vst [vmem:[#allocation8 + $0x88] sm:$0xff] %v710
    %775 = vst [vmem:[#allocation8 + $0x90] sm:$0xff] %v711
    %776 = vst [vmem:[#allocation8 + $0x98] sm:$0xff] %v712
    %777 = vst [vmem:[#allocation8 + $0xa0] sm:$0xff] %v713
    %778 = vst [vmem:[#allocation8 + $0xa8] sm:$0xff] %v714
    %779 = vst [vmem:[#allocation8 + $0xb0] sm:$0xff] %v715
    %780 = vst [vmem:[#allocation8 + $0xb8] sm:$0xff] %v716
    %781 = vst [vmem:[#allocation8 + $0xc0] sm:$0xff] %v717
    %782 = vst [vmem:[#allocation8 + $0xc8] sm:$0xff] %v718
    %783 = vst [vmem:[#allocation8 + $0xd0] sm:$0xff] %v719
    %784 = vst [vmem:[#allocation8 + $0xd8] sm:$0xff] %v720
    %785 = vst [vmem:[#allocation8 + $0xe0] sm:$0xff] %v721
    %786 = vst [vmem:[#allocation8 + $0xe8] sm:$0xff] %v722
    %787 = vst [vmem:[#allocation8 + $0xf0] sm:$0xff] %v723
    %788 = vst [vmem:[#allocation8 + $0xf8] sm:$0xff] %v724
    %v789 = vld [vmem:[%s4] sm:$0x3]
    %v790 = vunpack.c.l.bf16 %v789
    %v792 = vlaneseq
    %v793 = vshrl.u32 %v792, 7
    %v794 = vsub.s32 0, %v793
    %v795 = vrot.slane %v790, %v794
    %v796 = vlaneseq
    %v797 = vshrl.u32 %v796, 7
    %v798 = vsub.s32 2, %v797
    %v799 = vrot.slane %v790, %v798
    %v802 = vlaneseq
    %v803 = vshrl.u32 %v802, 7
    %v804 = vsub.s32 0, %v803
    %v805 = vrot.slane %v795, %v804
    %v806 = vlaneseq
    %v807 = vshrl.u32 %v806, 7
    %v808 = vsub.s32 0, %v807
    %v809 = vrot.slane %v799, %v808
    %v810 = vmul.f32 %v501, %v805
    %v811 = vmul.f32 %v502, %v809
    %v812 = vmul.f32 %v503, %v805
    %v813 = vmul.f32 %v504, %v809
    %v814 = vmul.f32 %v505, %v805
    %v815 = vmul.f32 %v506, %v809
    %v816 = vmul.f32 %v507, %v805
    %v817 = vmul.f32 %v508, %v809
    %v818 = vmul.f32 %v509, %v805
    %v819 = vmul.f32 %v510, %v809
    %v820 = vmul.f32 %v511, %v805
    %v821 = vmul.f32 %v512, %v809
    %v822 = vmul.f32 %v513, %v805
    %v823 = vmul.f32 %v514, %v809
    %v824 = vmul.f32 %v515, %v805
    %v825 = vmul.f32 %v516, %v809
    %v826 = vmul.f32 %v517, %v805
    %v827 = vmul.f32 %v518, %v809
    %v828 = vmul.f32 %v519, %v805
    %v829 = vmul.f32 %v520, %v809
    %v830 = vmul.f32 %v521, %v805
    %v831 = vmul.f32 %v522, %v809
    %v832 = vmul.f32 %v523, %v805
    %v833 = vmul.f32 %v524, %v809
    %v834 = vmul.f32 %v525, %v805
    %v835 = vmul.f32 %v526, %v809
    %v836 = vmul.f32 %v527, %v805
    %v837 = vmul.f32 %v528, %v809
    %v838 = vmul.f32 %v529, %v805
    %v839 = vmul.f32 %v530, %v809
    %v840 = vmul.f32 %v531, %v805
    %v841 = vmul.f32 %v532, %v809
    %v842 = vmul.f32 %v533, %v805
    %v843 = vmul.f32 %v534, %v809
    %v844 = vmul.f32 %v535, %v805
    %v845 = vmul.f32 %v536, %v809
    %v846 = vmul.f32 %v537, %v805
    %v847 = vmul.f32 %v538, %v809
    %v848 = vmul.f32 %v539, %v805
    %v849 = vmul.f32 %v540, %v809
    %v850 = vmul.f32 %v541, %v805
    %v851 = vmul.f32 %v542, %v809
    %v852 = vmul.f32 %v543, %v805
    %v853 = vmul.f32 %v544, %v809
    %v854 = vmul.f32 %v545, %v805
    %v855 = vmul.f32 %v546, %v809
    %v856 = vmul.f32 %v547, %v805
    %v857 = vmul.f32 %v548, %v809
    %v858 = vmul.f32 %v549, %v805
    %v859 = vmul.f32 %v550, %v809
    %v860 = vmul.f32 %v551, %v805
    %v861 = vmul.f32 %v552, %v809
    %v862 = vmul.f32 %v553, %v805
    %v863 = vmul.f32 %v554, %v809
    %v864 = vmul.f32 %v555, %v805
    %v865 = vmul.f32 %v556, %v809
    %v866 = vmul.f32 %v557, %v805
    %v867 = vmul.f32 %v558, %v809
    %v868 = vmul.f32 %v559, %v805
    %v869 = vmul.f32 %v560, %v809
    %v870 = vmul.f32 %v561, %v805
    %v871 = vmul.f32 %v562, %v809
    %v872 = vmul.f32 %v563, %v805
    %v873 = vmul.f32 %v564, %v809
    %v874 = vadd.f32 %v810, %v811
    %875 = vadd.xlane.f32.xlu0 %v874
    %v876 = vpop.xlane.xlu0 %875
    %v877 = vadd.f32 %v812, %v813
    %878 = vadd.xlane.f32.xlu0 %v877
    %v879 = vpop.xlane.xlu0 %878
    %v880 = vadd.f32 %v814, %v815
    %881 = vadd.xlane.f32.xlu0 %v880
    %v882 = vpop.xlane.xlu0 %881
    %v883 = vadd.f32 %v816, %v817
    %884 = vadd.xlane.f32.xlu0 %v883
    %v885 = vpop.xlane.xlu0 %884
    %v886 = vadd.f32 %v818, %v819
    %887 = vadd.xlane.f32.xlu0 %v886
    %v888 = vpop.xlane.xlu0 %887
    %v889 = vadd.f32 %v820, %v821
    %890 = vadd.xlane.f32.xlu0 %v889
    %v891 = vpop.xlane.xlu0 %890
    %v892 = vadd.f32 %v822, %v823
    %893 = vadd.xlane.f32.xlu0 %v892
    %v894 = vpop.xlane.xlu0 %893
    %v895 = vadd.f32 %v824, %v825
    %896 = vadd.xlane.f32.xlu0 %v895
    %v897 = vpop.xlane.xlu0 %896
    %v898 = vadd.f32 %v826, %v827
    %899 = vadd.xlane.f32.xlu0 %v898
    %v900 = vpop.xlane.xlu0 %899
    %v901 = vadd.f32 %v828, %v829
    %902 = vadd.xlane.f32.xlu0 %v901
    %v903 = vpop.xlane.xlu0 %902
    %v904 = vadd.f32 %v830, %v831
    %905 = vadd.xlane.f32.xlu0 %v904
    %v906 = vpop.xlane.xlu0 %905
    %v907 = vadd.f32 %v832, %v833
    %908 = vadd.xlane.f32.xlu0 %v907
    %v909 = vpop.xlane.xlu0 %908
    %v910 = vadd.f32 %v834, %v835
    %911 = vadd.xlane.f32.xlu0 %v910
    %v912 = vpop.xlane.xlu0 %911
    %v913 = vadd.f32 %v836, %v837
    %914 = vadd.xlane.f32.xlu0 %v913
    %v915 = vpop.xlane.xlu0 %914
    %v916 = vadd.f32 %v838, %v839
    %917 = vadd.xlane.f32.xlu0 %v916
    %v918 = vpop.xlane.xlu0 %917
    %v919 = vadd.f32 %v840, %v841
    %920 = vadd.xlane.f32.xlu0 %v919
    %v921 = vpop.xlane.xlu0 %920
    %v922 = vadd.f32 %v842, %v843
    %923 = vadd.xlane.f32.xlu0 %v922
    %v924 = vpop.xlane.xlu0 %923
    %v925 = vadd.f32 %v844, %v845
    %926 = vadd.xlane.f32.xlu0 %v925
    %v927 = vpop.xlane.xlu0 %926
    %v928 = vadd.f32 %v846, %v847
    %929 = vadd.xlane.f32.xlu0 %v928
    %v930 = vpop.xlane.xlu0 %929
    %v931 = vadd.f32 %v848, %v849
    %932 = vadd.xlane.f32.xlu0 %v931
    %v933 = vpop.xlane.xlu0 %932
    %v934 = vadd.f32 %v850, %v851
    %935 = vadd.xlane.f32.xlu0 %v934
    %v936 = vpop.xlane.xlu0 %935
    %v937 = vadd.f32 %v852, %v853
    %938 = vadd.xlane.f32.xlu0 %v937
    %v939 = vpop.xlane.xlu0 %938
    %v940 = vadd.f32 %v854, %v855
    %941 = vadd.xlane.f32.xlu0 %v940
    %v942 = vpop.xlane.xlu0 %941
    %v943 = vadd.f32 %v856, %v857
    %944 = vadd.xlane.f32.xlu0 %v943
    %v945 = vpop.xlane.xlu0 %944
    %v946 = vadd.f32 %v858, %v859
    %947 = vadd.xlane.f32.xlu0 %v946
    %v948 = vpop.xlane.xlu0 %947
    %v949 = vadd.f32 %v860, %v861
    %950 = vadd.xlane.f32.xlu0 %v949
    %v951 = vpop.xlane.xlu0 %950
    %v952 = vadd.f32 %v862, %v863
    %953 = vadd.xlane.f32.xlu0 %v952
    %v954 = vpop.xlane.xlu0 %953
    %v955 = vadd.f32 %v864, %v865
    %956 = vadd.xlane.f32.xlu0 %v955
    %v957 = vpop.xlane.xlu0 %956
    %v958 = vadd.f32 %v866, %v867
    %959 = vadd.xlane.f32.xlu0 %v958
    %v960 = vpop.xlane.xlu0 %959
    %v961 = vadd.f32 %v868, %v869
    %962 = vadd.xlane.f32.xlu0 %v961
    %v963 = vpop.xlane.xlu0 %962
    %v964 = vadd.f32 %v870, %v871
    %965 = vadd.xlane.f32.xlu0 %v964
    %v966 = vpop.xlane.xlu0 %965
    %v967 = vadd.f32 %v872, %v873
    %968 = vadd.xlane.f32.xlu0 %v967
    %v969 = vpop.xlane.xlu0 %968
    %v970 = vxor.u32 %v876, 2147483648
    %v971 = vxor.u32 %v879, 2147483648
    %v972 = vxor.u32 %v882, 2147483648
    %v973 = vxor.u32 %v885, 2147483648
    %v974 = vxor.u32 %v888, 2147483648
    %v975 = vxor.u32 %v891, 2147483648
    %v976 = vxor.u32 %v894, 2147483648
    %v977 = vxor.u32 %v897, 2147483648
    %v978 = vxor.u32 %v900, 2147483648
    %v979 = vxor.u32 %v903, 2147483648
    %v980 = vxor.u32 %v906, 2147483648
    %v981 = vxor.u32 %v909, 2147483648
    %v982 = vxor.u32 %v912, 2147483648
    %v983 = vxor.u32 %v915, 2147483648
    %v984 = vxor.u32 %v918, 2147483648
    %v985 = vxor.u32 %v921, 2147483648
    %v986 = vxor.u32 %v924, 2147483648
    %v987 = vxor.u32 %v927, 2147483648
    %v988 = vxor.u32 %v930, 2147483648
    %v989 = vxor.u32 %v933, 2147483648
    %v990 = vxor.u32 %v936, 2147483648
    %v991 = vxor.u32 %v939, 2147483648
    %v992 = vxor.u32 %v942, 2147483648
    %v993 = vxor.u32 %v945, 2147483648
    %v994 = vxor.u32 %v948, 2147483648
    %v995 = vxor.u32 %v951, 2147483648
    %v996 = vxor.u32 %v954, 2147483648
    %v997 = vxor.u32 %v957, 2147483648
    %v998 = vxor.u32 %v960, 2147483648
    %v999 = vxor.u32 %v963, 2147483648
    %v1000 = vxor.u32 %v966, 2147483648
    %v1001 = vxor.u32 %v969, 2147483648
    %v1002 = vmul.f32 %v970, 1.442695
    %v1003 = vpow.pop %v1002
    %v1004 = vmul.f32 %v971, 1.442695
    %v1005 = vpow.pop %v1004
    %v1006 = vmul.f32 %v972, 1.442695
    %v1007 = vpow.pop %v1006
    %v1008 = vmul.f32 %v973, 1.442695
    %v1009 = vpow.pop %v1008
    %v1010 = vmul.f32 %v974, 1.442695
    %v1011 = vpow.pop %v1010
    %v1012 = vmul.f32 %v975, 1.442695
    %v1013 = vpow.pop %v1012
    %v1014 = vmul.f32 %v976, 1.442695
    %v1015 = vpow.pop %v1014
    %v1016 = vmul.f32 %v977, 1.442695
    %v1017 = vpow.pop %v1016
    %v1018 = vmul.f32 %v978, 1.442695
    %v1019 = vpow.pop %v1018
    %v1020 = vmul.f32 %v979, 1.442695
    %v1021 = vpow.pop %v1020
    %v1022 = vmul.f32 %v980, 1.442695
    %v1023 = vpow.pop %v1022
    %v1024 = vmul.f32 %v981, 1.442695
    %v1025 = vpow.pop %v1024
    %v1026 = vmul.f32 %v982, 1.442695
    %v1027 = vpow.pop %v1026
    %v1028 = vmul.f32 %v983, 1.442695
    %v1029 = vpow.pop %v1028
    %v1030 = vmul.f32 %v984, 1.442695
    %v1031 = vpow.pop %v1030
    %v1032 = vmul.f32 %v985, 1.442695
    %v1033 = vpow.pop %v1032
    %v1034 = vmul.f32 %v986, 1.442695
    %v1035 = vpow.pop %v1034
    %v1036 = vmul.f32 %v987, 1.442695
    %v1037 = vpow.pop %v1036
    %v1038 = vmul.f32 %v988, 1.442695
    %v1039 = vpow.pop %v1038
    %v1040 = vmul.f32 %v989, 1.442695
    %v1041 = vpow.pop %v1040
    %v1042 = vmul.f32 %v990, 1.442695
    %v1043 = vpow.pop %v1042
    %v1044 = vmul.f32 %v991, 1.442695
    %v1045 = vpow.pop %v1044
    %v1046 = vmul.f32 %v992, 1.442695
    %v1047 = vpow.pop %v1046
    %v1048 = vmul.f32 %v993, 1.442695
    %v1049 = vpow.pop %v1048
    %v1050 = vmul.f32 %v994, 1.442695
    %v1051 = vpow.pop %v1050
    %v1052 = vmul.f32 %v995, 1.442695
    %v1053 = vpow.pop %v1052
    %v1054 = vmul.f32 %v996, 1.442695
    %v1055 = vpow.pop %v1054
    %v1056 = vmul.f32 %v997, 1.442695
    %v1057 = vpow.pop %v1056
    %v1058 = vmul.f32 %v998, 1.442695
    %v1059 = vpow.pop %v1058
    %v1060 = vmul.f32 %v999, 1.442695
    %v1061 = vpow.pop %v1060
    %v1062 = vmul.f32 %v1000, 1.442695
    %v1063 = vpow.pop %v1062
    %v1064 = vmul.f32 %v1001, 1.442695
    %v1065 = vpow.pop %v1064
    %v1066 = vadd.f32 %v1003, 1.0
    %v1067 = vadd.f32 %v1005, 1.0
    %v1068 = vadd.f32 %v1007, 1.0
    %v1069 = vadd.f32 %v1009, 1.0
    %v1070 = vadd.f32 %v1011, 1.0
    %v1071 = vadd.f32 %v1013, 1.0
    %v1072 = vadd.f32 %v1015, 1.0
    %v1073 = vadd.f32 %v1017, 1.0
    %v1074 = vadd.f32 %v1019, 1.0
    %v1075 = vadd.f32 %v1021, 1.0
    %v1076 = vadd.f32 %v1023, 1.0
    %v1077 = vadd.f32 %v1025, 1.0
    %v1078 = vadd.f32 %v1027, 1.0
    %v1079 = vadd.f32 %v1029, 1.0
    %v1080 = vadd.f32 %v1031, 1.0
    %v1081 = vadd.f32 %v1033, 1.0
    %v1082 = vadd.f32 %v1035, 1.0
    %v1083 = vadd.f32 %v1037, 1.0
    %v1084 = vadd.f32 %v1039, 1.0
    %v1085 = vadd.f32 %v1041, 1.0
    %v1086 = vadd.f32 %v1043, 1.0
    %v1087 = vadd.f32 %v1045, 1.0
    %v1088 = vadd.f32 %v1047, 1.0
    %v1089 = vadd.f32 %v1049, 1.0
    %v1090 = vadd.f32 %v1051, 1.0
    %v1091 = vadd.f32 %v1053, 1.0
    %v1092 = vadd.f32 %v1055, 1.0
    %v1093 = vadd.f32 %v1057, 1.0
    %v1094 = vadd.f32 %v1059, 1.0
    %v1095 = vadd.f32 %v1061, 1.0
    %v1096 = vadd.f32 %v1063, 1.0
    %v1097 = vadd.f32 %v1065, 1.0
    %v1098 = vrcp.pop %v1066
    %v1099 = vmul.f32 1.0, %v1098
    %v1100 = vrcp.pop %v1067
    %v1101 = vmul.f32 1.0, %v1100
    %v1102 = vrcp.pop %v1068
    %v1103 = vmul.f32 1.0, %v1102
    %v1104 = vrcp.pop %v1069
    %v1105 = vmul.f32 1.0, %v1104
    %v1106 = vrcp.pop %v1070
    %v1107 = vmul.f32 1.0, %v1106
    %v1108 = vrcp.pop %v1071
    %v1109 = vmul.f32 1.0, %v1108
    %v1110 = vrcp.pop %v1072
    %v1111 = vmul.f32 1.0, %v1110
    %v1112 = vrcp.pop %v1073
    %v1113 = vmul.f32 1.0, %v1112
    %v1114 = vrcp.pop %v1074
    %v1115 = vmul.f32 1.0, %v1114
    %v1116 = vrcp.pop %v1075
    %v1117 = vmul.f32 1.0, %v1116
    %v1118 = vrcp.pop %v1076
    %v1119 = vmul.f32 1.0, %v1118
    %v1120 = vrcp.pop %v1077
    %v1121 = vmul.f32 1.0, %v1120
    %v1122 = vrcp.pop %v1078
    %v1123 = vmul.f32 1.0, %v1122
    %v1124 = vrcp.pop %v1079
    %v1125 = vmul.f32 1.0, %v1124
    %v1126 = vrcp.pop %v1080
    %v1127 = vmul.f32 1.0, %v1126
    %v1128 = vrcp.pop %v1081
    %v1129 = vmul.f32 1.0, %v1128
    %v1130 = vrcp.pop %v1082
    %v1131 = vmul.f32 1.0, %v1130
    %v1132 = vrcp.pop %v1083
    %v1133 = vmul.f32 1.0, %v1132
    %v1134 = vrcp.pop %v1084
    %v1135 = vmul.f32 1.0, %v1134
    %v1136 = vrcp.pop %v1085
    %v1137 = vmul.f32 1.0, %v1136
    %v1138 = vrcp.pop %v1086
    %v1139 = vmul.f32 1.0, %v1138
    %v1140 = vrcp.pop %v1087
    %v1141 = vmul.f32 1.0, %v1140
    %v1142 = vrcp.pop %v1088
    %v1143 = vmul.f32 1.0, %v1142
    %v1144 = vrcp.pop %v1089
    %v1145 = vmul.f32 1.0, %v1144
    %v1146 = vrcp.pop %v1090
    %v1147 = vmul.f32 1.0, %v1146
    %v1148 = vrcp.pop %v1091
    %v1149 = vmul.f32 1.0, %v1148
    %v1150 = vrcp.pop %v1092
    %v1151 = vmul.f32 1.0, %v1150
    %v1152 = vrcp.pop %v1093
    %v1153 = vmul.f32 1.0, %v1152
    %v1154 = vrcp.pop %v1094
    %v1155 = vmul.f32 1.0, %v1154
    %v1156 = vrcp.pop %v1095
    %v1157 = vmul.f32 1.0, %v1156
    %v1158 = vrcp.pop %v1096
    %v1159 = vmul.f32 1.0, %v1158
    %v1160 = vrcp.pop %v1097
    %v1161 = vmul.f32 1.0, %v1160
    %v1194 = vlaneseq
    %v1195 = vand.u32 %v1194, 127
    %v1196 = vlaneseq
    %v1197 = vshrl.u32 %v1196, 7
    %v1198 = vsub.s32 %v1195, %v1197
    %v1199 = vrot.slane %v1099, %v1198
    %v1200 = vadd.s32 %v1195, 4294967288
    %v1201 = vlaneseq
    %v1202 = vshrl.u32 %v1201, 7
    %v1203 = vsub.s32 %v1200, %v1202
    %v1204 = vrot.slane %v1101, %v1203
    %vm1205 = vcmask 130112
    %v1206 = vsel %vm1205, %v1204, %v1199
    %v1207 = vadd.s32 %v1195, 4294967280
    %v1208 = vlaneseq
    %v1209 = vshrl.u32 %v1208, 7
    %v1210 = vsub.s32 %v1207, %v1209
    %v1211 = vrot.slane %v1103, %v1210
    %vm1212 = vcmask 195712
    %v1213 = vsel %vm1212, %v1211, %v1206
    %v1214 = vadd.s32 %v1195, 4294967272
    %v1215 = vlaneseq
    %v1216 = vshrl.u32 %v1215, 7
    %v1217 = vsub.s32 %v1214, %v1216
    %v1218 = vrot.slane %v1105, %v1217
    %vm1219 = vcmask 261312
    %v1220 = vsel %vm1219, %v1218, %v1213
    %v1221 = vadd.s32 %v1195, 4294967264
    %v1222 = vlaneseq
    %v1223 = vshrl.u32 %v1222, 7
    %v1224 = vsub.s32 %v1221, %v1223
    %v1225 = vrot.slane %v1107, %v1224
    %vm1226 = vcmask 326912
    %v1227 = vsel %vm1226, %v1225, %v1220
    %v1228 = vadd.s32 %v1195, 4294967256
    %v1229 = vlaneseq
    %v1230 = vshrl.u32 %v1229, 7
    %v1231 = vsub.s32 %v1228, %v1230
    %v1232 = vrot.slane %v1109, %v1231
    %vm1233 = vcmask 392512
    %v1234 = vsel %vm1233, %v1232, %v1227
    %v1235 = vadd.s32 %v1195, 4294967248
    %v1236 = vlaneseq
    %v1237 = vshrl.u32 %v1236, 7
    %v1238 = vsub.s32 %v1235, %v1237
    %v1239 = vrot.slane %v1111, %v1238
    %vm1240 = vcmask 458112
    %v1241 = vsel %vm1240, %v1239, %v1234
    %v1242 = vadd.s32 %v1195, 4294967240
    %v1243 = vlaneseq
    %v1244 = vshrl.u32 %v1243, 7
    %v1245 = vsub.s32 %v1242, %v1244
    %v1246 = vrot.slane %v1113, %v1245
    %vm1247 = vcmask 523712
    %v1248 = vsel %vm1247, %v1246, %v1241
    %v1249 = vadd.s32 %v1195, 4294967232
    %v1250 = vlaneseq
    %v1251 = vshrl.u32 %v1250, 7
    %v1252 = vsub.s32 %v1249, %v1251
    %v1253 = vrot.slane %v1115, %v1252
    %vm1254 = vcmask 589312
    %v1255 = vsel %vm1254, %v1253, %v1248
    %v1256 = vadd.s32 %v1195, 4294967224
    %v1257 = vlaneseq
    %v1258 = vshrl.u32 %v1257, 7
    %v1259 = vsub.s32 %v1256, %v1258
    %v1260 = vrot.slane %v1117, %v1259
    %vm1261 = vcmask 654912
    %v1262 = vsel %vm1261, %v1260, %v1255
    %v1263 = vadd.s32 %v1195, 4294967216
    %v1264 = vlaneseq
    %v1265 = vshrl.u32 %v1264, 7
    %v1266 = vsub.s32 %v1263, %v1265
    %v1267 = vrot.slane %v1119, %v1266
    %vm1268 = vcmask 720512
    %v1269 = vsel %vm1268, %v1267, %v1262
    %v1270 = vadd.s32 %v1195, 4294967208
    %v1271 = vlaneseq
    %v1272 = vshrl.u32 %v1271, 7
    %v1273 = vsub.s32 %v1270, %v1272
    %v1274 = vrot.slane %v1121, %v1273
    %vm1275 = vcmask 786112
    %v1276 = vsel %vm1275, %v1274, %v1269
    %v1277 = vadd.s32 %v1195, 4294967200
    %v1278 = vlaneseq
    %v1279 = vshrl.u32 %v1278, 7
    %v1280 = vsub.s32 %v1277, %v1279
    %v1281 = vrot.slane %v1123, %v1280
    %vm1282 = vcmask 851712
    %v1283 = vsel %vm1282, %v1281, %v1276
    %v1284 = vadd.s32 %v1195, 4294967192
    %v1285 = vlaneseq
    %v1286 = vshrl.u32 %v1285, 7
    %v1287 = vsub.s32 %v1284, %v1286
    %v1288 = vrot.slane %v1125, %v1287
    %vm1289 = vcmask 917312
    %v1290 = vsel %vm1289, %v1288, %v1283
    %v1291 = vadd.s32 %v1195, 4294967184
    %v1292 = vlaneseq
    %v1293 = vshrl.u32 %v1292, 7
    %v1294 = vsub.s32 %v1291, %v1293
    %v1295 = vrot.slane %v1127, %v1294
    %vm1296 = vcmask 982912
    %v1297 = vsel %vm1296, %v1295, %v1290
    %v1298 = vadd.s32 %v1195, 4294967176
    %v1299 = vlaneseq
    %v1300 = vshrl.u32 %v1299, 7
    %v1301 = vsub.s32 %v1298, %v1300
    %v1302 = vrot.slane %v1129, %v1301
    %vm1303 = vcmask 1048512
    %v1304 = vsel %vm1303, %v1302, %v1297
    %v1305 = vlaneseq
    %v1306 = vshrl.u32 %v1305, 7
    %v1307 = vsub.s32 %v1195, %v1306
    %v1308 = vrot.slane %v1131, %v1307
    %v1309 = vlaneseq
    %v1310 = vshrl.u32 %v1309, 7
    %v1311 = vsub.s32 %v1200, %v1310
    %v1312 = vrot.slane %v1133, %v1311
    %v1313 = vsel %vm1205, %v1312, %v1308
    %v1314 = vlaneseq
    %v1315 = vshrl.u32 %v1314, 7
    %v1316 = vsub.s32 %v1207, %v1315
    %v1317 = vrot.slane %v1135, %v1316
    %v1318 = vsel %vm1212, %v1317, %v1313
    %v1319 = vlaneseq
    %v1320 = vshrl.u32 %v1319, 7
    %v1321 = vsub.s32 %v1214, %v1320
    %v1322 = vrot.slane %v1137, %v1321
    %v1323 = vsel %vm1219, %v1322, %v1318
    %v1324 = vlaneseq
    %v1325 = vshrl.u32 %v1324, 7
    %v1326 = vsub.s32 %v1221, %v1325
    %v1327 = vrot.slane %v1139, %v1326
    %v1328 = vsel %vm1226, %v1327, %v1323
    %v1329 = vlaneseq
    %v1330 = vshrl.u32 %v1329, 7
    %v1331 = vsub.s32 %v1228, %v1330
    %v1332 = vrot.slane %v1141, %v1331
    %v1333 = vsel %vm1233, %v1332, %v1328
    %v1334 = vlaneseq
    %v1335 = vshrl.u32 %v1334, 7
    %v1336 = vsub.s32 %v1235, %v1335
    %v1337 = vrot.slane %v1143, %v1336
    %v1338 = vsel %vm1240, %v1337, %v1333
    %v1339 = vlaneseq
    %v1340 = vshrl.u32 %v1339, 7
    %v1341 = vsub.s32 %v1242, %v1340
    %v1342 = vrot.slane %v1145, %v1341
    %v1343 = vsel %vm1247, %v1342, %v1338
    %v1344 = vlaneseq
    %v1345 = vshrl.u32 %v1344, 7
    %v1346 = vsub.s32 %v1249, %v1345
    %v1347 = vrot.slane %v1147, %v1346
    %v1348 = vsel %vm1254, %v1347, %v1343
    %v1349 = vlaneseq
    %v1350 = vshrl.u32 %v1349, 7
    %v1351 = vsub.s32 %v1256, %v1350
    %v1352 = vrot.slane %v1149, %v1351
    %v1353 = vsel %vm1261, %v1352, %v1348
    %v1354 = vlaneseq
    %v1355 = vshrl.u32 %v1354, 7
    %v1356 = vsub.s32 %v1263, %v1355
    %v1357 = vrot.slane %v1151, %v1356
    %v1358 = vsel %vm1268, %v1357, %v1353
    %v1359 = vlaneseq
    %v1360 = vshrl.u32 %v1359, 7
    %v1361 = vsub.s32 %v1270, %v1360
    %v1362 = vrot.slane %v1153, %v1361
    %v1363 = vsel %vm1275, %v1362, %v1358
    %v1364 = vlaneseq
    %v1365 = vshrl.u32 %v1364, 7
    %v1366 = vsub.s32 %v1277, %v1365
    %v1367 = vrot.slane %v1155, %v1366
    %v1368 = vsel %vm1282, %v1367, %v1363
    %v1369 = vlaneseq
    %v1370 = vshrl.u32 %v1369, 7
    %v1371 = vsub.s32 %v1284, %v1370
    %v1372 = vrot.slane %v1157, %v1371
    %v1373 = vsel %vm1289, %v1372, %v1368
    %v1374 = vlaneseq
    %v1375 = vshrl.u32 %v1374, 7
    %v1376 = vsub.s32 %v1291, %v1375
    %v1377 = vrot.slane %v1159, %v1376
    %v1378 = vsel %vm1296, %v1377, %v1373
    %v1379 = vlaneseq
    %v1380 = vshrl.u32 %v1379, 7
    %v1381 = vsub.s32 %v1298, %v1380
    %v1382 = vrot.slane %v1161, %v1381
    %v1383 = vsel %vm1303, %v1382, %v1378
    %1386 = vst [vmem:[#allocation9] sm:$0x1] %v1304
    %1387 = vst [vmem:[#allocation9 + $0x1] sm:$0x1] %v1383
    %v1388 = vld [vmem:[%s1] sm:$0x1]
    %v1389 = vld [vmem:[%s1 + $0x1] sm:$0x1]
    %vm1390 = vcmask 1040384
    %v1391 = vsel %vm1390, %v1388, 0.0
    %1392 = vadd.xlane.f32.xlu0 %v1391
    %v1393 = vpop.xlane.xlu0 %1392
    %v1394 = vsel %vm1390, %v1389, 0.0
    %1395 = vadd.xlane.f32.xlu0 %v1394
    %v1396 = vpop.xlane.xlu0 %1395
    %v1397 = vmax.f32 %v1393, 1.0
    %v1398 = vmax.f32 %v1396, 1.0
    %v1399 = vpack.c.bf16 %v1388, %v1388
    %v1400 = vpack.c.bf16 %v1389, %v1389
    %1401 = vmatprep.subr.bf16.mxu0 %v566
    %1402 = vmatpush1.bf16.msra.mxu0 %v565
    %1403 = vmatprep.subr.bf16.mxu0 %v568
    %1404 = vmatpush1.bf16.msra.mxu0 %v567
    %1405 = vmatprep.subr.bf16.mxu0 %v570
    %1406 = vmatpush1.bf16.msra.mxu0 %v569
    %1407 = vmatprep.subr.bf16.mxu0 %v572
    %1408 = vmatpush1.bf16.msra.mxu0 %v571
    %1409 = vmatprep.subr.bf16.mxu0 %v574
    %1410 = vmatpush1.bf16.msra.mxu0 %v573
    %1411 = vmatprep.subr.bf16.mxu0 %v576
    %1412 = vmatpush1.bf16.msra.mxu0 %v575
    %1413 = vmatprep.subr.bf16.mxu0 %v578
    %1414 = vmatpush1.bf16.msra.mxu0 %v577
    %1415 = vmatprep.subr.bf16.mxu0 %v580
    %1416 = vmatpush1.bf16.msra.mxu0 %v579
    %1417 = vmatprep.subr.bf16.mxu0 0
    %1418 = vmatpush1.bf16.msra.mxu0 0
    %1419 = vmatprep.subr.bf16.mxu0 0
    %1420 = vmatpush1.bf16.msra.mxu0 0
    %1421 = vmatprep.subr.bf16.mxu0 0
    %1422 = vmatpush1.bf16.msra.mxu0 0
    %1423 = vmatprep.subr.bf16.mxu0 0
    %1424 = vmatpush1.bf16.msra.mxu0 0
    %1425 = vmatprep.subr.bf16.mxu0 0
    %1426 = vmatpush1.bf16.msra.mxu0 0
    %1427 = vmatprep.subr.bf16.mxu0 0
    %1428 = vmatpush1.bf16.msra.mxu0 0
    %1429 = vmatprep.subr.bf16.mxu0 0
    %1430 = vmatpush1.bf16.msra.mxu0 0
    %1431 = vmatprep.subr.bf16.mxu0 0
    %1432 = vmatpush1.bf16.msra.mxu0 0
    %1433 = vmatprep.mubr.bf16.mxu0 0
    %1434 = vmatmul.mubr.bf16.gmra.mrb[0].mxu0 %v1399
    %v1435 = vpop.f32.mrb[0].mxu0
    %v1436 = vadd.f32 0.0, %v1435
    %v1437 = vpop.f32.mrb[0].mxu0
    %v1438 = vadd.f32 0.0, %v1437
    %v1439 = vpop.f32.mrb[0].mxu0
    %v1440 = vpop.f32.mrb[0].mxu0
    %1441 = vdwg.mxu0
    %1442 = vmatprep.subr.bf16.mxu0 %v582
    %1443 = vmatpush1.bf16.msra.mxu0 %v581
    %1444 = vmatprep.subr.bf16.mxu0 %v584
    %1445 = vmatpush1.bf16.msra.mxu0 %v583
    %1446 = vmatprep.subr.bf16.mxu0 %v586
    %1447 = vmatpush1.bf16.msra.mxu0 %v585
    %1448 = vmatprep.subr.bf16.mxu0 %v588
    %1449 = vmatpush1.bf16.msra.mxu0 %v587
    %1450 = vmatprep.subr.bf16.mxu0 %v590
    %1451 = vmatpush1.bf16.msra.mxu0 %v589
    %1452 = vmatprep.subr.bf16.mxu0 %v592
    %1453 = vmatpush1.bf16.msra.mxu0 %v591
    %1454 = vmatprep.subr.bf16.mxu0 %v594
    %1455 = vmatpush1.bf16.msra.mxu0 %v593
    %1456 = vmatprep.subr.bf16.mxu0 %v596
    %1457 = vmatpush1.bf16.msra.mxu0 %v595
    %1458 = vmatprep.subr.bf16.mxu0 0
    %1459 = vmatpush1.bf16.msra.mxu0 0
    %1460 = vmatprep.subr.bf16.mxu0 0
    %1461 = vmatpush1.bf16.msra.mxu0 0
    %1462 = vmatprep.subr.bf16.mxu0 0
    %1463 = vmatpush1.bf16.msra.mxu0 0
    %1464 = vmatprep.subr.bf16.mxu0 0
    %1465 = vmatpush1.bf16.msra.mxu0 0
    %1466 = vmatprep.subr.bf16.mxu0 0
    %1467 = vmatpush1.bf16.msra.mxu0 0
    %1468 = vmatprep.subr.bf16.mxu0 0
    %1469 = vmatpush1.bf16.msra.mxu0 0
    %1470 = vmatprep.subr.bf16.mxu0 0
    %1471 = vmatpush1.bf16.msra.mxu0 0
    %1472 = vmatprep.subr.bf16.mxu0 0
    %1473 = vmatpush1.bf16.msra.mxu0 0
    %1474 = vmatprep.mubr.bf16.mxu0 0
    %1475 = vmatmul.mubr.bf16.gmra.mrb[0].mxu0 %v1400
    %v1476 = vpop.f32.mrb[0].mxu0
    %v1477 = vadd.f32 0.0, %v1476
    %v1478 = vpop.f32.mrb[0].mxu0
    %v1479 = vadd.f32 0.0, %v1478
    %v1480 = vpop.f32.mrb[0].mxu0
    %v1481 = vpop.f32.mrb[0].mxu0
    %1482 = vdwg.mxu0
    %v1483 = vrcp.pop %v1397
    %v1484 = vmul.f32 %v1436, %v1483
    %v1485 = vmul.f32 %v1438, %v1483
    %v1486 = vrcp.pop %v1398
    %v1487 = vmul.f32 %v1477, %v1486
    %v1488 = vmul.f32 %v1479, %v1486
    %v1489 = vpack.c.bf16 %v1484, %v1484
    %v1490 = vpack.c.bf16 %v1485, %v1485
    %v1491 = vpack.c.bf16 %v1487, %v1487
    %v1492 = vpack.c.bf16 %v1488, %v1488
    %v1493 = vld [vmem:[#allocation7] sm:$0xff]
    %v1494 = vld [vmem:[#allocation7 + $0x8] sm:$0xff]
    %v1495 = vld [vmem:[#allocation7 + $0x10] sm:$0xff]
    %v1496 = vld [vmem:[#allocation7 + $0x18] sm:$0xff]
    %v1497 = vld [vmem:[#allocation7 + $0x20] sm:$0xff]
    %v1498 = vld [vmem:[#allocation7 + $0x28] sm:$0xff]
    %v1499 = vld [vmem:[#allocation7 + $0x30] sm:$0xff]
    %v1500 = vld [vmem:[#allocation7 + $0x38] sm:$0xff]
    %v1501 = vld [vmem:[#allocation7 + $0x40] sm:$0xff]
    %v1502 = vld [vmem:[#allocation7 + $0x48] sm:$0xff]
    %v1503 = vld [vmem:[#allocation7 + $0x50] sm:$0xff]
    %v1504 = vld [vmem:[#allocation7 + $0x58] sm:$0xff]
    %v1505 = vld [vmem:[#allocation7 + $0x60] sm:$0xff]
    %v1506 = vld [vmem:[#allocation7 + $0x68] sm:$0xff]
    %v1507 = vld [vmem:[#allocation7 + $0x70] sm:$0xff]
    %v1508 = vld [vmem:[#allocation7 + $0x78] sm:$0xff]
    %v1509 = vld [vmem:[#allocation7 + $0x80] sm:$0xff]
    %v1510 = vld [vmem:[#allocation7 + $0x88] sm:$0xff]
    %v1511 = vld [vmem:[#allocation7 + $0x90] sm:$0xff]
    %v1512 = vld [vmem:[#allocation7 + $0x98] sm:$0xff]
    %v1513 = vld [vmem:[#allocation7 + $0xa0] sm:$0xff]
    %v1514 = vld [vmem:[#allocation7 + $0xa8] sm:$0xff]
    %v1515 = vld [vmem:[#allocation7 + $0xb0] sm:$0xff]
    %v1516 = vld [vmem:[#allocation7 + $0xb8] sm:$0xff]
    %v1517 = vld [vmem:[#allocation7 + $0xc0] sm:$0xff]
    %v1518 = vld [vmem:[#allocation7 + $0xc8] sm:$0xff]
    %v1519 = vld [vmem:[#allocation7 + $0xd0] sm:$0xff]
    %v1520 = vld [vmem:[#allocation7 + $0xd8] sm:$0xff]
    %v1521 = vld [vmem:[#allocation7 + $0xe0] sm:$0xff]
    %v1522 = vld [vmem:[#allocation7 + $0xe8] sm:$0xff]
    %v1523 = vld [vmem:[#allocation7 + $0xf0] sm:$0xff]
    %v1524 = vld [vmem:[#allocation7 + $0xf8] sm:$0xff]
    %v1529 = vunpack.c.l.b16 %v1489
    %v1530 = vunpack.c.l.b16 %v1490
    %v1531 = vunpack.c.l.b16 %v1491
    %v1532 = vunpack.c.l.b16 %v1492
    %v1533 = vrot.slane %v1531, 7
    %vm1534 = vcmask 1041409
    %v1535 = vsel %vm1534, %v1533, %v1529
    %v1536 = vrot.slane %v1532, 7
    %v1537 = vsel %vm1534, %v1536, %v1530
    %v1538 = vpack.c.b16 %v1535, %v1535
    %v1539 = vpack.c.b16 %v1537, %v1537
    %v1574 = vunpack.c.l.b16 %v1493
    %v1575 = vunpack.c.h.b16 %v1493
    %v1576 = vunpack.c.l.b16 %v1494
    %v1577 = vunpack.c.h.b16 %v1494
    %v1578 = vunpack.c.l.b16 %v1495
    %v1579 = vunpack.c.h.b16 %v1495
    %v1580 = vunpack.c.l.b16 %v1496
    %v1581 = vunpack.c.h.b16 %v1496
    %v1582 = vunpack.c.l.b16 %v1497
    %v1583 = vunpack.c.h.b16 %v1497
    %v1584 = vunpack.c.l.b16 %v1498
    %v1585 = vunpack.c.h.b16 %v1498
    %v1586 = vunpack.c.l.b16 %v1499
    %v1587 = vunpack.c.h.b16 %v1499
    %v1588 = vunpack.c.l.b16 %v1500
    %v1589 = vunpack.c.h.b16 %v1500
    %v1590 = vunpack.c.l.b16 %v1501
    %v1591 = vunpack.c.h.b16 %v1501
    %v1592 = vunpack.c.l.b16 %v1502
    %v1593 = vunpack.c.h.b16 %v1502
    %v1594 = vunpack.c.l.b16 %v1503
    %v1595 = vunpack.c.h.b16 %v1503
    %v1596 = vunpack.c.l.b16 %v1504
    %v1597 = vunpack.c.h.b16 %v1504
    %v1598 = vunpack.c.l.b16 %v1505
    %v1599 = vunpack.c.h.b16 %v1505
    %v1600 = vunpack.c.l.b16 %v1506
    %v1601 = vunpack.c.h.b16 %v1506
    %v1602 = vunpack.c.l.b16 %v1507
    %v1603 = vunpack.c.h.b16 %v1507
    %v1604 = vunpack.c.l.b16 %v1508
    %v1605 = vunpack.c.h.b16 %v1508
    %v1606 = vunpack.c.l.b16 %v1509
    %v1607 = vunpack.c.h.b16 %v1509
    %v1608 = vunpack.c.l.b16 %v1510
    %v1609 = vunpack.c.h.b16 %v1510
    %v1610 = vunpack.c.l.b16 %v1511
    %v1611 = vunpack.c.h.b16 %v1511
    %v1612 = vunpack.c.l.b16 %v1512
    %v1613 = vunpack.c.h.b16 %v1512
    %v1614 = vunpack.c.l.b16 %v1513
    %v1615 = vunpack.c.h.b16 %v1513
    %v1616 = vunpack.c.l.b16 %v1514
    %v1617 = vunpack.c.h.b16 %v1514
    %v1618 = vunpack.c.l.b16 %v1515
    %v1619 = vunpack.c.h.b16 %v1515
    %v1620 = vunpack.c.l.b16 %v1516
    %v1621 = vunpack.c.h.b16 %v1516
    %v1622 = vunpack.c.l.b16 %v1517
    %v1623 = vunpack.c.h.b16 %v1517
    %v1624 = vunpack.c.l.b16 %v1518
    %v1625 = vunpack.c.h.b16 %v1518
    %v1626 = vunpack.c.l.b16 %v1519
    %v1627 = vunpack.c.h.b16 %v1519
    %v1628 = vunpack.c.l.b16 %v1520
    %v1629 = vunpack.c.h.b16 %v1520
    %v1630 = vunpack.c.l.b16 %v1521
    %v1631 = vunpack.c.h.b16 %v1521
    %v1632 = vunpack.c.l.b16 %v1522
    %v1633 = vunpack.c.h.b16 %v1522
    %v1634 = vunpack.c.l.b16 %v1523
    %v1635 = vunpack.c.h.b16 %v1523
    %v1636 = vunpack.c.l.b16 %v1524
    %v1637 = vunpack.c.h.b16 %v1524
    %v1638 = vpack.c.b16 %v1576, %v1574
    %v1639 = vpack.c.b16 %v1577, %v1575
    %v1640 = vpack.c.b16 %v1580, %v1578
    %v1641 = vpack.c.b16 %v1581, %v1579
    %v1642 = vpack.c.b16 %v1584, %v1582
    %v1643 = vpack.c.b16 %v1585, %v1583
    %v1644 = vpack.c.b16 %v1588, %v1586
    %v1645 = vpack.c.b16 %v1589, %v1587
    %v1646 = vpack.c.b16 %v1592, %v1590
    %v1647 = vpack.c.b16 %v1593, %v1591
    %v1648 = vpack.c.b16 %v1596, %v1594
    %v1649 = vpack.c.b16 %v1597, %v1595
    %v1650 = vpack.c.b16 %v1600, %v1598
    %v1651 = vpack.c.b16 %v1601, %v1599
    %v1652 = vpack.c.b16 %v1604, %v1602
    %v1653 = vpack.c.b16 %v1605, %v1603
    %v1654 = vpack.c.b16 %v1608, %v1606
    %v1655 = vpack.c.b16 %v1609, %v1607
    %v1656 = vpack.c.b16 %v1612, %v1610
    %v1657 = vpack.c.b16 %v1613, %v1611
    %v1658 = vpack.c.b16 %v1616, %v1614
    %v1659 = vpack.c.b16 %v1617, %v1615
    %v1660 = vpack.c.b16 %v1620, %v1618
    %v1661 = vpack.c.b16 %v1621, %v1619
    %v1662 = vpack.c.b16 %v1624, %v1622
    %v1663 = vpack.c.b16 %v1625, %v1623
    %v1664 = vpack.c.b16 %v1628, %v1626
    %v1665 = vpack.c.b16 %v1629, %v1627
    %v1666 = vpack.c.b16 %v1632, %v1630
    %v1667 = vpack.c.b16 %v1633, %v1631
    %v1668 = vpack.c.b16 %v1636, %v1634
    %v1669 = vpack.c.b16 %v1637, %v1635
    %1702 = vmatprep.subr.bf16.mxu0 %v1639
    %1703 = vmatpush1.bf16.msra.mxu0 %v1638
    %1704 = vmatprep.subr.bf16.mxu0 %v1641
    %1705 = vmatpush1.bf16.msra.mxu0 %v1640
    %1706 = vmatprep.subr.bf16.mxu0 %v1643
    %1707 = vmatpush1.bf16.msra.mxu0 %v1642
    %1708 = vmatprep.subr.bf16.mxu0 %v1645
    %1709 = vmatpush1.bf16.msra.mxu0 %v1644
    %1710 = vmatprep.subr.bf16.mxu0 %v1647
    %1711 = vmatpush1.bf16.msra.mxu0 %v1646
    %1712 = vmatprep.subr.bf16.mxu0 %v1649
    %1713 = vmatpush1.bf16.msra.mxu0 %v1648
    %1714 = vmatprep.subr.bf16.mxu0 %v1651
    %1715 = vmatpush1.bf16.msra.mxu0 %v1650
    %1716 = vmatprep.subr.bf16.mxu0 %v1653
    %1717 = vmatpush1.bf16.msra.mxu0 %v1652
    %1718 = vmatprep.subr.bf16.mxu0 %v1655
    %1719 = vmatpush1.bf16.msra.mxu0 %v1654
    %1720 = vmatprep.subr.bf16.mxu0 %v1657
    %1721 = vmatpush1.bf16.msra.mxu0 %v1656
    %1722 = vmatprep.subr.bf16.mxu0 %v1659
    %1723 = vmatpush1.bf16.msra.mxu0 %v1658
    %1724 = vmatprep.subr.bf16.mxu0 %v1661
    %1725 = vmatpush1.bf16.msra.mxu0 %v1660
    %1726 = vmatprep.subr.bf16.mxu0 %v1663
    %1727 = vmatpush1.bf16.msra.mxu0 %v1662
    %1728 = vmatprep.subr.bf16.mxu0 %v1665
    %1729 = vmatpush1.bf16.msra.mxu0 %v1664
    %1730 = vmatprep.subr.bf16.mxu0 %v1667
    %1731 = vmatpush1.bf16.msra.mxu0 %v1666
    %1732 = vmatprep.subr.bf16.mxu0 %v1669
    %1733 = vmatpush1.bf16.msra.mxu0 %v1668
    %1734 = vmatprep.mubr.bf16.mxu0 %v1539
    %1735 = vmatmul.mubr.bf16.gmra.mrb[0].mxu0 %v1538
    %v1736 = vpop.f32.mrb[0].mxu0
    %v1737 = vadd.f32 0.0, %v1736
    %v1738 = vpop.f32.mrb[0].mxu0
    %v1739 = vadd.f32 0.0, %v1738
    %v1740 = vpop.f32.mrb[0].mxu0
    %v1741 = vpop.f32.mrb[0].mxu0
    %1742 = vdwg.mxu0
    %v1743 = vtanh.pop %v1737
    %v1744 = vtanh.pop %v1739
    %v1747 = vunpack.c.l.s4 1966171168
    %v1748 = vunpack.c.0.s8 %v1747
    %v1749 = vlaneseq
    %v1750 = vshrl.u32 %v1749, 7
    %v1751 = vsub.s32 %v1748, %v1750
    %v1752 = vrot.slane %v1743, %v1751
    %v1753 = vcombine.high %v1752, %v1752
    %v1755 = vunpack.c.l.s4 1966171168
    %v1756 = vunpack.c.0.s8 %v1755
    %v1757 = vlaneseq
    %v1758 = vshrl.u32 %v1757, 7
    %v1759 = vsub.s32 %v1756, %v1758
    %v1760 = vrot.slane %v1752, %v1759
    %v1762 = vunpack.c.l.s4 1966171168
    %v1763 = vunpack.c.0.s8 %v1762
    %v1764 = vlaneseq
    %v1765 = vshrl.u32 %v1764, 7
    %v1766 = vsub.s32 %v1763, %v1765
    %v1767 = vrot.slane %v1753, %v1766
    %1770 = vst [vmem:[#allocation11] sm:$0x1] %v1760
    %1771 = vst [vmem:[#allocation11 + $0x1] sm:$0x1] %v1767
    %v1774 = vunpack.c.l.s4 1966171168
    %v1775 = vunpack.c.0.s8 %v1774
    %v1776 = vlaneseq
    %v1777 = vshrl.u32 %v1776, 7
    %v1778 = vsub.s32 %v1775, %v1777
    %v1779 = vrot.slane %v1744, %v1778
    %v1780 = vcombine.high %v1779, %v1779
    %v1782 = vunpack.c.l.s4 1966171168
    %v1783 = vunpack.c.0.s8 %v1782
    %v1784 = vlaneseq
    %v1785 = vshrl.u32 %v1784, 7
    %v1786 = vsub.s32 %v1783, %v1785
    %v1787 = vrot.slane %v1779, %v1786
    %v1789 = vunpack.c.l.s4 1966171168
    %v1790 = vunpack.c.0.s8 %v1789
    %v1791 = vlaneseq
    %v1792 = vshrl.u32 %v1791, 7
    %v1793 = vsub.s32 %v1790, %v1792
    %v1794 = vrot.slane %v1780, %v1793
    %1797 = vst [vmem:[#allocation12] sm:$0x1] %v1787
    %1798 = vst [vmem:[#allocation12 + $0x1] sm:$0x1] %v1794
    // Predicated region
    $region38: #{tpu_custom_call.1} parent=1 // pred_check
      _
    $region39: #{tpu_custom_call.1} parent=1 // pred_check_branch
      %1800 = sbr.rel (0) target = $region41
    $region40: #{tpu_custom_call.1} parent=1 // pred_region
      %s1802 = ssub.s32 4096, 4096
      %1803 = vsyncadd [#allocation4], %s1802
      %s1804 = sshll.u32 [#allocation8], 4
      %s1805 = int_to_ptr.vmem [resolvable:$true] %s1804
      %1810 = dma.vmem_to_hbm [thread:$0]  %s1805, 4096, %s6, [#allocation4], 128, 128, 8
    $region41: #{tpu_custom_call.1} parent=1 // pred_fallthru
      _
    // Predicated region
    $region42: #{tpu_custom_call.1} parent=1 // pred_check
      _
    $region43: #{tpu_custom_call.1} parent=1 // pred_check_branch
      %1812 = sbr.rel (0) target = $region45
    $region44: #{tpu_custom_call.1} parent=1 // pred_region
      %s1814 = ssub.s32 32, 32
      %1815 = vsyncadd [#allocation10], %s1814
      %s1816 = sshll.u32 [#allocation9], 4
      %s1817 = int_to_ptr.vmem [resolvable:$true] %s1816
      %1822 = dma.vmem_to_hbm [thread:$0]  %s1817, 32, %s7, [#allocation10], 16, 16, 1
    $region45: #{tpu_custom_call.1} parent=1 // pred_fallthru
      _
    // Predicated region
    $region46: #{tpu_custom_call.1} parent=1 // pred_check
      _
    $region47: #{tpu_custom_call.1} parent=1 // pred_check_branch
      %1824 = sbr.rel (0) target = $region49
    $region48: #{tpu_custom_call.1} parent=1 // pred_region
      %s1826 = ssub.s32 32, 32
      %1827 = vsyncadd [#allocation10], %s1826
      %s1828 = sshll.u32 [#allocation11], 4
      %s1829 = int_to_ptr.vmem [resolvable:$true] %s1828
      %1834 = dma.vmem_to_hbm [thread:$0]  %s1829, 32, %s8, [#allocation10], 16, 16, 1
    $region49: #{tpu_custom_call.1} parent=1 // pred_fallthru
      _
    // Predicated region
    $region50: #{tpu_custom_call.1} parent=1 // pred_check
      _
    $region51: #{tpu_custom_call.1} parent=1 // pred_check_branch
      %1836 = sbr.rel (0) target = $region53
    $region52: #{tpu_custom_call.1} parent=1 // pred_region
      %s1838 = ssub.s32 32, 32
      %1839 = vsyncadd [#allocation13], %s1838
      %s1840 = sshll.u32 [#allocation12], 4
      %s1841 = int_to_ptr.vmem [resolvable:$true] %s1840
      %1846 = dma.vmem_to_hbm [thread:$0]  %s1841, 32, %s9, [#allocation13], 16, 16, 1
    $region53: #{tpu_custom_call.1} parent=1 // pred_fallthru
      _
    // Predicated region
    $region54: #{tpu_custom_call.1} parent=1 // pred_check
      _
    $region55: #{tpu_custom_call.1} parent=1 // pred_check_branch
      %1848 = sbr.rel (0) target = $region57
    $region56: #{tpu_custom_call.1} parent=1 // pred_region
      %1849 = dma.done [#allocation4], 4096
    $region57: #{tpu_custom_call.1} parent=1 // pred_fallthru
      _
    // Predicated region
    $region58: #{tpu_custom_call.1} parent=1 // pred_check
      _
    $region59: #{tpu_custom_call.1} parent=1 // pred_check_branch
      %1851 = sbr.rel (0) target = $region61
    $region60: #{tpu_custom_call.1} parent=1 // pred_region
      %1852 = dma.done [#allocation10], 32
    $region61: #{tpu_custom_call.1} parent=1 // pred_fallthru
      _
    // Predicated region
    $region62: #{tpu_custom_call.1} parent=1 // pred_check
      _
    $region63: #{tpu_custom_call.1} parent=1 // pred_check_branch
      %1854 = sbr.rel (0) target = $region65
    $region64: #{tpu_custom_call.1} parent=1 // pred_region
      %1855 = dma.done [#allocation10], 32
    $region65: #{tpu_custom_call.1} parent=1 // pred_fallthru
      _
    // Predicated region
    $region66: #{tpu_custom_call.1} parent=1 // pred_check
      _
    $region67: #{tpu_custom_call.1} parent=1 // pred_check_branch
      %1857 = sbr.rel (0) target = $region69
    $region68: #{tpu_custom_call.1} parent=1 // pred_region
      %1858 = dma.done [#allocation13], 32
    $region69: #{tpu_custom_call.1} parent=1 // pred_fallthru
      _
    %1859 = vsyncpa [#allocation3], 1
    %1860 = vsyncpa [#allocation6], 1
    %1861 = vsyncpa [#allocation4], 1
    %1862 = vsyncpa [#allocation10], 1
    %1863 = vsyncpa [#allocation13], 1

</llo_original>
